<compile_context>
chip_gen: v7x
topology: tpu7x:2x2x1
jax: 0.10.0
libtpu: 0.0.40
codegen_flags: <defaults>
</compile_context>

<pallas_src>
import jax
import jax.numpy as jnp
import numpy as np
from jax import lax
from jax.experimental import pallas as pl
from jax.experimental.pallas import tpu as pltpu  # noqa: F401  (TPU backend; no TPU-specific ops needed here)

# ----------------------------- config (small) -------------------------------
IMG = 16
IN_CH = 4
PATCH = 4
D_MODEL = 32
D_STATE = 16
DEPTH = 2
EXPANSION = 2
NUM_CLASSES = 10
BATCH = 2

NUM_PATCHES = (IMG // PATCH) ** 2            # 16
PATCH_DIM = IN_CH * PATCH * PATCH            # 64
D_HIDDEN = D_MODEL * EXPANSION               # 64
LN_EPS = 1e-5
VEC_WIDTH = 128                              # lane width of the packed slabs
OUT_PAD = 128                                # lane-dense classifier output
SCAN_STEPS = int(np.ceil(np.log2(NUM_PATCHES)))   # 4

# per-layer slab row offsets (all multiples of 8 -> aligned sublane ref slices)
R_BW = 0                                     # [b_w | time_w^T]           (D, S+1)
R_CO = R_BW + D_MODEL                        # [[c_w@o_w],[Dp*o_w]]       (S+D, D)
R_MI = R_CO + D_STATE + D_MODEL              # mlp_in weight              (D, 2H)
R_MO = R_MI + D_MODEL                        # mlp_out weight             (H, D)
R_VEC = R_MO + D_HIDDEN                      # packed bias/gain rows
VEC_SECTION = 16
LS_ROWS = R_VEC + VEC_SECTION                # 192 rows per layer


# ----------------------------- kernel helpers -------------------------------
def _layernorm(v, g, b):
    mu = jnp.mean(v, axis=-1, keepdims=True)
    var = jnp.mean(jnp.square(v - mu), axis=-1, keepdims=True)
    return (v - mu) * lax.rsqrt(var + LN_EPS) * g + b


# ----------------------------- fused pallas kernel --------------------------
def fused_forward_kernel(p_ref, misc_ref, lay_ref, o_ref):
    bn = p_ref.shape[0]                      # B * NUM_PATCHES tokens (folded batch)
    nbatch = o_ref.shape[0]
    npatch = bn // nbatch
    S, D, H = D_STATE, D_MODEL, D_HIDDEN

    # ---- misc slab unpack (static, aligned ref slices; lanes padded to 128) ----
    m_pos = PATCH_DIM
    m_clsw = m_pos + bn
    m_head = m_clsw + D
    patch_w = misc_ref[0:PATCH_DIM, :]                     # (PATCH_DIM, 128)
    pm = misc_ref[m_pos:m_pos + bn, :]                     # (BN, 128)
    pos_bias = pm[:, :D]                                   # (BN, D)
    masks = pm[:, D:D + SCAN_STEPS]                        # (BN, SCAN_STEPS)
    cls_w = misc_ref[m_clsw:m_clsw + D, :]                 # (D, 128)
    head = misc_ref[m_head:m_head + 8, :]
    norm_g, norm_b = head[0:1, :D], head[1:2, :D]
    cls_b = head[2:3, :]                                   # (1, 128)

    # ---- patch embedding (+ positional): whole batch in one matmul ----
    x = jnp.dot(p_ref[...], patch_w,
                preferred_element_type=jnp.float32)[:, :D] + pos_bias     # (BN, D)

    for l in range(DEPTH):                                 # static unroll (DEPTH=2)
        bw = lay_ref[l, R_BW:R_BW + D, :]                  # (D, 128), [:, :S+1] valid
        co_w = lay_ref[l, R_CO:R_CO + S + D, :]            # (S+D, 128), [:, :D] valid
        mi_w = lay_ref[l, R_MI:R_MI + D, :]                # (D, 2H) exactly 128 lanes
        mo_w = lay_ref[l, R_MO:R_MO + H, :]                # (H, 128), [:, :D] valid
        vec = lay_ref[l, R_VEC:R_VEC + VEC_SECTION, :]     # (16, 128) bias/gain rows
        n1_g, n1_b = vec[0:1, :D], vec[1:2, :D]
        n2_g, n2_b = vec[2:3, :D], vec[3:4, :D]
        a_row = vec[4:5, :S]
        bb = vec[5:6, :]                                   # [b_b | t_b] padded
        co_b = vec[6:7, :D]
        mi_b = vec[7:8, :]
        mo_b = vec[8:9, :D]

        # ------------------------- SSM branch -------------------------
        xn = _layernorm(x, n1_g, n1_b)
        # fused [B_proj | time_proj] matmul; column S is the delta logit
        z = jnp.dot(xn, bw, preferred_element_type=jnp.float32) + bb      # (BN, 128)
        b_in = z[:, :S]                                                   # (BN, S)
        delta = jax.nn.sigmoid(z[:, S:S + 1]) * 0.99 + 0.01               # (BN, 1)
        a_in = jnp.exp(a_row * delta)                                     # (BN, S)

        # Segmented Hillis-Steele scan for h_t = a_t*h_{t-1} + b_t (h_0 from 0).
        # One static sublane roll per step on the packed (a|b) tile; rows with no
        # valid predecessor inside their sequence get the identity (a=1, b=0).
        ab = jnp.concatenate([a_in, b_in], axis=1)                        # (BN, 2S)
        for s in range(SCAN_STEPS):
            prev = jnp.roll(ab, 1 << s, axis=0)            # row i <- row i-2^s
            m = masks[:, s:s + 1]                          # (BN, 1) validity
            a_p = prev[:, :S] * m + (1.0 - m)
            b_p = prev[:, S:] * m
            a_c = ab[:, :S]
            ab = jnp.concatenate([a_c * a_p, a_c * b_p + ab[:, S:]], axis=1)
        hs = ab[:, S:]                                                    # (BN, S)

        # fused C_proj + D-skip + out_proj: single K=S+D matmul (exact algebra, host-fused)
        y = jnp.dot(jnp.concatenate([hs, xn], axis=1), co_w,
                    preferred_element_type=jnp.float32)[:, :D] + co_b
        x = x + y                                                         # residual

        # ---------------------- gated MLP branch ----------------------
        xn2 = _layernorm(x, n2_g, n2_b)
        mi = jnp.dot(xn2, mi_w, preferred_element_type=jnp.float32) + mi_b   # (BN, 2H)
        hid, gate = mi[:, :H], mi[:, H:]
        act = hid * (gate * jax.nn.sigmoid(gate))                         # hidden * silu(gate)
        x = x + jnp.dot(act, mo_w,
                        preferred_element_type=jnp.float32)[:, :D] + mo_b

    # ------------- head: LayerNorm -> per-sequence mean pool -> classifier -------------
    xn = _layernorm(x, norm_g, norm_b)                                    # (BN, D)
    pooled = jnp.concatenate(
        [jnp.mean(xn[b * npatch:(b + 1) * npatch, :], axis=0, keepdims=True)
         for b in range(nbatch)], axis=0)                                 # (B, D)
    o_ref[...] = jnp.dot(pooled, cls_w,
                         preferred_element_type=jnp.float32) + cls_b      # (B, 128) lane-dense


# ----------------------------- wrappers --------------------------------------
def extract_patches(imgs):
    # NCHW -> (B, num_patches, C*p*p); identical ordering to nn.Unfold + permute(0,2,1)
    B, C, H, W = imgs.shape
    p = PATCH
    x = imgs.reshape(B, C, H // p, p, W // p, p)
    x = x.transpose(0, 2, 4, 1, 3, 5)            # (B, H/p, W/p, C, p, p)
    return x.reshape(B, (H // p) * (W // p), C * p * p)


def mamba_classifier_forward(imgs, kp):
    B = imgs.shape[0]
    patches = extract_patches(imgs).reshape(B * NUM_PATCHES, PATCH_DIM)
    out = pl.pallas_call(
        fused_forward_kernel,
        out_shape=jax.ShapeDtypeStruct((B, OUT_PAD), jnp.float32),
    )(patches, kp["misc"], kp["layers"])
    return out[:, :NUM_CLASSES]


# ----------------------------- param packing ---------------------------------
def pack_params(params, batch):
    """Host-side packing: fuse time_proj into B_proj, fuse C_proj/D/out_proj into one
    weight, and pack everything into 2 lane-padded VMEM slabs (misc + per-layer)."""
    blocks = params["blocks"]
    bn = batch * NUM_PATCHES

    def pad_lanes(a):
        a = jnp.asarray(a, jnp.float32)
        return jnp.pad(a, ((0, 0), (0, VEC_WIDTH - a.shape[1])))

    def row(v):
        return pad_lanes(jnp.reshape(jnp.asarray(v, jnp.float32), (1, -1)))

    # ---- per-layer slab: [bw | co_w | mi_w | mo_w | bias rows], 128 lanes wide ----
    slabs = []
    for blk in blocks:
        bw = jnp.concatenate([blk["b_w"], jnp.transpose(blk["t_w"])], axis=1)       # (D, S+1)
        co_w = jnp.concatenate([blk["c_w"] @ blk["o_w"],                            # (S, D)
                                jnp.reshape(blk["Dp"], (-1, 1)) * blk["o_w"]],      # (D, D)
                               axis=0)                                              # (S+D, D)
        co_b = blk["c_b"] @ blk["o_w"] + blk["o_b"]                                 # (1, D)
        vec = jnp.concatenate(
            [row(blk["n1_g"]), row(blk["n1_b"]), row(blk["n2_g"]), row(blk["n2_b"]),
             row(blk["A"]),
             row(jnp.concatenate([blk["b_b"], blk["t_b"]], axis=1)),
             row(co_b), row(blk["mi_b"]), row(blk["mo_b"])], axis=0)
        vec = jnp.pad(vec, ((0, VEC_SECTION - vec.shape[0]), (0, 0)))
        slabs.append(jnp.concatenate(
            [pad_lanes(bw), pad_lanes(co_w), pad_lanes(blk["mi_w"]),
             pad_lanes(blk["mo_w"]), vec], axis=0))
    layers = jnp.stack(slabs, axis=0)                       # (DEPTH, LS_ROWS, 128)
    assert layers.shape == (DEPTH, LS_ROWS, VEC_WIDTH)

    # ---- misc slab: patch_w | (pos_bias + scan masks) | cls_w | head rows ----
    pos_bias = jnp.tile(params["pos"] + params["patch_b"], (batch, 1))    # (BN, D)
    mask = np.zeros((bn, SCAN_STEPS), np.float32)           # 1.0 where predecessor valid
    for s in range(SCAN_STEPS):
        k = 1 << s
        for i in range(bn):
            if (i % NUM_PATCHES) >= k:
                mask[i, s] = 1.0
    posmask = jnp.concatenate([pos_bias, jnp.asarray(mask)], axis=1)      # (BN, D+steps)
    misc = jnp.concatenate([
        pad_lanes(params["patch_w"]),                       # rows [0, PATCH_DIM)
        pad_lanes(posmask),                                 # rows [PATCH_DIM, +BN)
        pad_lanes(params["cls_w"]),                         # rows [.., +D)
        row(params["norm_g"]), row(params["norm_b"]), row(params["cls_b"]),
        jnp.zeros((5, VEC_WIDTH), jnp.float32),             # pad head section to 8 rows
    ], axis=0)
    assert misc.shape[0] == PATCH_DIM + bn + D_MODEL + 8
    return {"misc": misc, "layers": layers}


# ----------------------------- params -----------------------------------------
def init_params(key):
    keys = iter(jax.random.split(key, 64))

    def lin(fan_in, fan_out):
        w = jax.random.normal(next(keys), (fan_in, fan_out), jnp.float32) / np.sqrt(fan_in)
        b = jnp.zeros((1, fan_out), jnp.float32)
        return w, b

    params = {}
    params["patch_w"], params["patch_b"] = lin(PATCH_DIM, D_MODEL)
    params["pos"] = 0.02 * jax.random.normal(next(keys), (NUM_PATCHES, D_MODEL), jnp.float32)

    blocks = []
    for _ in range(DEPTH):
        blk = {
            "n1_g": jnp.ones((1, D_MODEL), jnp.float32),
            "n1_b": jnp.zeros((1, D_MODEL), jnp.float32),
            "n2_g": jnp.ones((1, D_MODEL), jnp.float32),
            "n2_b": jnp.zeros((1, D_MODEL), jnp.float32),
            "A": 0.1 * jax.random.normal(next(keys), (1, D_STATE), jnp.float32) - 1.0,
            "Dp": jnp.ones((1, D_MODEL), jnp.float32),
            "t_w": jax.random.normal(next(keys), (1, D_MODEL), jnp.float32) / np.sqrt(D_MODEL),
            "t_b": jnp.zeros((1, 1), jnp.float32),
        }
        blk["b_w"], blk["b_b"] = lin(D_MODEL, D_STATE)
        blk["c_w"], blk["c_b"] = lin(D_STATE, D_MODEL)
        blk["o_w"], blk["o_b"] = lin(D_MODEL, D_MODEL)
        blk["mi_w"], blk["mi_b"] = lin(D_MODEL, 2 * D_HIDDEN)
        blk["mo_w"], blk["mo_b"] = lin(D_HIDDEN, D_MODEL)
        blocks.append(blk)
    params["blocks"] = blocks

    params["norm_g"] = jnp.ones((1, D_MODEL), jnp.float32)
    params["norm_b"] = jnp.zeros((1, D_MODEL), jnp.float32)
    params["cls_w"], params["cls_b"] = lin(D_MODEL, NUM_CLASSES)
    return params


# ----------------------------- pure-JAX reference ---------------------------
def reference_forward(imgs, params):
    def ln(v, g, b):
        mu = v.mean(-1, keepdims=True)
        var = ((v - mu) ** 2).mean(-1, keepdims=True)
        return (v - mu) / jnp.sqrt(var + LN_EPS) * g + b

    x = extract_patches(imgs) @ params["patch_w"] + params["patch_b"] + params["pos"]
    for p in params["blocks"]:
        xn = ln(x, p["n1_g"], p["n1_b"])
        delta = jax.nn.sigmoid(jnp.sum(xn * p["t_w"], -1, keepdims=True) + p["t_b"]) * 0.99 + 0.01
        b_in = xn @ p["b_w"] + p["b_b"]
        a_exp = jnp.exp(p["A"] * delta)                             # (B, N, S)

        def step(h, ab):
            a_t, b_t = ab
            h = a_t * h + b_t
            return h, h

        h0 = jnp.zeros((x.shape[0], D_STATE), jnp.float32)
        _, hs = lax.scan(step, h0, (a_exp.transpose(1, 0, 2), b_in.transpose(1, 0, 2)))
        hs = hs.transpose(1, 0, 2)
        y = (hs @ p["c_w"] + p["c_b"]) + xn * p["Dp"]
        y = y @ p["o_w"] + p["o_b"]
        x = x + y
        xn2 = ln(x, p["n2_g"], p["n2_b"])
        mi = xn2 @ p["mi_w"] + p["mi_b"]
        hpart, gate = mi[..., :D_HIDDEN], mi[..., D_HIDDEN:]
        x = x + (hpart * (gate * jax.nn.sigmoid(gate))) @ p["mo_w"] + p["mo_b"]

    xn = ln(x, params["norm_g"], params["norm_b"])
    return xn.mean(axis=1) @ params["cls_w"] + params["cls_b"]


# ----------------------------- main ------------------------------------------
if __name__ == "__main__":
    key = jax.random.PRNGKey(0)
    k_param, k_img = jax.random.split(key)
    params = init_params(k_param)
    kp = pack_params(params, BATCH)
    imgs = jax.random.normal(k_img, (BATCH, IN_CH, IMG, IMG), jnp.float32)

    fwd = jax.jit(mamba_classifier_forward)
    logits = jax.block_until_ready(fwd(imgs, kp))
    ref = jax.block_until_ready(reference_forward(imgs, params))

    assert logits.shape == (BATCH, NUM_CLASSES)
    np.testing.assert_allclose(np.asarray(logits), np.asarray(ref), rtol=1e-2, atol=1e-2)
    print("KERNEL_OK")
</pallas_src>

<mosaic_0001>
module attributes {stable_mosaic.version = 11 : i64} {
  func.func @fused_forward_kernel(%arg0: memref<32x64xf32, #tpu.memory_space<vmem>>, %arg1: memref<136x128xf32, #tpu.memory_space<vmem>>, %arg2: memref<2x192x128xf32, #tpu.memory_space<vmem>>, %arg3: memref<2x128xf32, #tpu.memory_space<vmem>>) attributes {dimension_semantics = [], scalar_prefetch = 0 : i64, scratch_operands = 0 : i64, tpu.core_type = #tpu.core_type<tc>} {
    %c0 = arith.constant 0 : index
    %c0_0 = arith.constant 0 : index
    %0 = vector.load %arg1[%c0, %c0_0] : memref<136x128xf32, #tpu.memory_space<vmem>>, vector<64x128xf32>
    %c64 = arith.constant 64 : index
    %c0_1 = arith.constant 0 : index
    %1 = vector.load %arg1[%c64, %c0_1] : memref<136x128xf32, #tpu.memory_space<vmem>>, vector<32x128xf32>
    %2 = vector.extract_strided_slice %1 {offsets = [0, 0], sizes = [32, 32], strides = [1, 1]} : vector<32x128xf32> to vector<32x32xf32>
    %3 = vector.extract_strided_slice %1 {offsets = [0, 32], sizes = [32, 4], strides = [1, 1]} : vector<32x128xf32> to vector<32x4xf32>
    %c96 = arith.constant 96 : index
    %c0_2 = arith.constant 0 : index
    %4 = vector.load %arg1[%c96, %c0_2] : memref<136x128xf32, #tpu.memory_space<vmem>>, vector<32x128xf32>
    %c128 = arith.constant 128 : index
    %c0_3 = arith.constant 0 : index
    %5 = vector.load %arg1[%c128, %c0_3] : memref<136x128xf32, #tpu.memory_space<vmem>>, vector<8x128xf32>
    %6 = vector.extract_strided_slice %5 {offsets = [0, 0], sizes = [1, 32], strides = [1, 1]} : vector<8x128xf32> to vector<1x32xf32>
    %7 = vector.extract_strided_slice %5 {offsets = [1, 0], sizes = [1, 32], strides = [1, 1]} : vector<8x128xf32> to vector<1x32xf32>
    %8 = vector.extract_strided_slice %5 {offsets = [2, 0], sizes = [1, 128], strides = [1, 1]} : vector<8x128xf32> to vector<1x128xf32>
    %c0_4 = arith.constant 0 : index
    %c0_5 = arith.constant 0 : index
    %9 = vector.load %arg0[%c0_4, %c0_5] : memref<32x64xf32, #tpu.memory_space<vmem>>, vector<32x64xf32>
    %cst = arith.constant dense<0.000000e+00> : vector<32x128xf32>
    %10 = tpu.matmul %9, %0, %cst {dimension_numbers = #tpu.dot_dimension_numbers<[1], [0], [0], [1], [0, 0, 1, 1], [], []>} : vector<32x64xf32>, vector<64x128xf32>, vector<32x128xf32> -> vector<32x128xf32>
    %11 = vector.extract_strided_slice %10 {offsets = [0, 0], sizes = [32, 32], strides = [1, 1]} : vector<32x128xf32> to vector<32x32xf32>
    %12 = arith.addf %11, %2 : vector<32x32xf32>
    %c0_6 = arith.constant 0 : index
    %c0_7 = arith.constant 0 : index
    %c0_8 = arith.constant 0 : index
    %13 = vector.load %arg2[%c0_6, %c0_7, %c0_8] : memref<2x192x128xf32, #tpu.memory_space<vmem>>, vector<1x32x128xf32>
    %14 = vector.shape_cast %13 : vector<1x32x128xf32> to vector<32x128xf32>
    %c0_9 = arith.constant 0 : index
    %c32 = arith.constant 32 : index
    %c0_10 = arith.constant 0 : index
    %15 = vector.load %arg2[%c0_9, %c32, %c0_10] : memref<2x192x128xf32, #tpu.memory_space<vmem>>, vector<1x48x128xf32>
    %16 = vector.shape_cast %15 : vector<1x48x128xf32> to vector<48x128xf32>
    %c0_11 = arith.constant 0 : index
    %c80 = arith.constant 80 : index
    %c0_12 = arith.constant 0 : index
    %17 = vector.load %arg2[%c0_11, %c80, %c0_12] : memref<2x192x128xf32, #tpu.memory_space<vmem>>, vector<1x32x128xf32>
    %18 = vector.shape_cast %17 : vector<1x32x128xf32> to vector<32x128xf32>
    %c0_13 = arith.constant 0 : index
    %c112 = arith.constant 112 : index
    %c0_14 = arith.constant 0 : index
    %19 = vector.load %arg2[%c0_13, %c112, %c0_14] : memref<2x192x128xf32, #tpu.memory_space<vmem>>, vector<1x64x128xf32>
    %20 = vector.shape_cast %19 : vector<1x64x128xf32> to vector<64x128xf32>
    %c0_15 = arith.constant 0 : index
    %c176 = arith.constant 176 : index
    %c0_16 = arith.constant 0 : index
    %21 = vector.load %arg2[%c0_15, %c176, %c0_16] : memref<2x192x128xf32, #tpu.memory_space<vmem>>, vector<1x16x128xf32>
    %22 = vector.shape_cast %21 : vector<1x16x128xf32> to vector<16x128xf32>
    %23 = vector.extract_strided_slice %22 {offsets = [0, 0], sizes = [1, 32], strides = [1, 1]} : vector<16x128xf32> to vector<1x32xf32>
    %24 = vector.extract_strided_slice %22 {offsets = [1, 0], sizes = [1, 32], strides = [1, 1]} : vector<16x128xf32> to vector<1x32xf32>
    %25 = vector.extract_strided_slice %22 {offsets = [2, 0], sizes = [1, 32], strides = [1, 1]} : vector<16x128xf32> to vector<1x32xf32>
    %26 = vector.extract_strided_slice %22 {offsets = [3, 0], sizes = [1, 32], strides = [1, 1]} : vector<16x128xf32> to vector<1x32xf32>
    %27 = vector.extract_strided_slice %22 {offsets = [4, 0], sizes = [1, 16], strides = [1, 1]} : vector<16x128xf32> to vector<1x16xf32>
    %28 = vector.extract_strided_slice %22 {offsets = [5, 0], sizes = [1, 128], strides = [1, 1]} : vector<16x128xf32> to vector<1x128xf32>
    %29 = vector.extract_strided_slice %22 {offsets = [6, 0], sizes = [1, 32], strides = [1, 1]} : vector<16x128xf32> to vector<1x32xf32>
    %30 = vector.extract_strided_slice %22 {offsets = [7, 0], sizes = [1, 128], strides = [1, 1]} : vector<16x128xf32> to vector<1x128xf32>
    %31 = vector.extract_strided_slice %22 {offsets = [8, 0], sizes = [1, 32], strides = [1, 1]} : vector<16x128xf32> to vector<1x32xf32>
    %cst_17 = arith.constant dense<0.000000e+00> : vector<32xf32>
    %32 = vector.multi_reduction <add>, %12, %cst_17 [1] : vector<32x32xf32> to vector<32xf32>
    %33 = vector.shape_cast %32 : vector<32xf32> to vector<32x1xf32>
    %cst_18 = arith.constant 3.200000e+01 : f32
    %34 = vector.broadcast %cst_18 : f32 to vector<32x1xf32>
    %35 = arith.divf %33, %34 : vector<32x1xf32>
    %36 = vector.broadcast %35 : vector<32x1xf32> to vector<32x32xf32>
    %37 = arith.subf %12, %36 : vector<32x32xf32>
    %38 = arith.mulf %37, %37 : vector<32x32xf32>
    %cst_19 = arith.constant dense<0.000000e+00> : vector<32xf32>
    %39 = vector.multi_reduction <add>, %38, %cst_19 [1] : vector<32x32xf32> to vector<32xf32>
    %40 = vector.shape_cast %39 : vector<32xf32> to vector<32x1xf32>
    %cst_20 = arith.constant 3.200000e+01 : f32
    %41 = vector.broadcast %cst_20 : f32 to vector<32x1xf32>
    %42 = arith.divf %40, %41 : vector<32x1xf32>
    %43 = vector.broadcast %35 : vector<32x1xf32> to vector<32x32xf32>
    %44 = arith.subf %12, %43 : vector<32x32xf32>
    %cst_21 = arith.constant 9.99999974E-6 : f32
    %45 = vector.broadcast %cst_21 : f32 to vector<32x1xf32>
    %46 = arith.addf %42, %45 : vector<32x1xf32>
    %47 = math.rsqrt %46 : vector<32x1xf32>
    %48 = vector.broadcast %47 : vector<32x1xf32> to vector<32x32xf32>
    %49 = arith.mulf %44, %48 : vector<32x32xf32>
    %50 = vector.broadcast %23 : vector<1x32xf32> to vector<32x32xf32>
    %51 = arith.mulf %49, %50 : vector<32x32xf32>
    %52 = vector.broadcast %24 : vector<1x32xf32> to vector<32x32xf32>
    %53 = arith.addf %51, %52 : vector<32x32xf32>
    %cst_22 = arith.constant dense<0.000000e+00> : vector<32x128xf32>
    %54 = tpu.matmul %53, %14, %cst_22 {dimension_numbers = #tpu.dot_dimension_numbers<[1], [0], [0], [1], [0, 0, 1, 1], [], []>} : vector<32x32xf32>, vector<32x128xf32>, vector<32x128xf32> -> vector<32x128xf32>
    %55 = vector.broadcast %28 : vector<1x128xf32> to vector<32x128xf32>
    %56 = arith.addf %54, %55 : vector<32x128xf32>
    %57 = vector.extract_strided_slice %56 {offsets = [0, 0], sizes = [32, 16], strides = [1, 1]} : vector<32x128xf32> to vector<32x16xf32>
    %58 = vector.extract_strided_slice %56 {offsets = [0, 16], sizes = [32, 1], strides = [1, 1]} : vector<32x128xf32> to vector<32x1xf32>
    %59 = arith.negf %58 : vector<32x1xf32>
    %60 = math.exp %59 : vector<32x1xf32>
    %cst_23 = arith.constant 1.000000e+00 : f32
    %61 = vector.broadcast %cst_23 : f32 to vector<32x1xf32>
    %62 = arith.addf %61, %60 : vector<32x1xf32>
    %63 = arith.divf %61, %62 : vector<32x1xf32>
    %cst_24 = arith.constant 9.900000e-01 : f32
    %64 = vector.broadcast %cst_24 : f32 to vector<32x1xf32>
    %65 = arith.mulf %63, %64 : vector<32x1xf32>
    %cst_25 = arith.constant 0.00999999977 : f32
    %66 = vector.broadcast %cst_25 : f32 to vector<32x1xf32>
    %67 = arith.addf %65, %66 : vector<32x1xf32>
    %68 = vector.broadcast %27 : vector<1x16xf32> to vector<32x16xf32>
    %69 = vector.broadcast %67 : vector<32x1xf32> to vector<32x16xf32>
    %70 = arith.mulf %68, %69 : vector<32x16xf32>
    %71 = math.exp %70 : vector<32x16xf32>
    %72 = tpu.concatenate %71, %57 in 1 : vector<32x16xf32>, vector<32x16xf32> -> vector<32x32xf32>
    %73 = vector.extract_strided_slice %72 {offsets = [31, 0], sizes = [1, 32], strides = [1, 1]} : vector<32x32xf32> to vector<1x32xf32>
    %74 = vector.extract_strided_slice %72 {offsets = [0, 0], sizes = [31, 32], strides = [1, 1]} : vector<32x32xf32> to vector<31x32xf32>
    %75 = tpu.concatenate %73, %74 in 0 : vector<1x32xf32>, vector<31x32xf32> -> vector<32x32xf32>
    %76 = vector.extract_strided_slice %3 {offsets = [0, 0], sizes = [32, 1], strides = [1, 1]} : vector<32x4xf32> to vector<32x1xf32>
    %77 = vector.extract_strided_slice %75 {offsets = [0, 0], sizes = [32, 16], strides = [1, 1]} : vector<32x32xf32> to vector<32x16xf32>
    %78 = vector.broadcast %76 : vector<32x1xf32> to vector<32x16xf32>
    %79 = arith.mulf %77, %78 : vector<32x16xf32>
    %cst_26 = arith.constant 1.000000e+00 : f32
    %80 = vector.broadcast %cst_26 : f32 to vector<32x1xf32>
    %81 = arith.subf %80, %76 : vector<32x1xf32>
    %82 = vector.broadcast %81 : vector<32x1xf32> to vector<32x16xf32>
    %83 = arith.addf %79, %82 : vector<32x16xf32>
    %84 = vector.extract_strided_slice %75 {offsets = [0, 16], sizes = [32, 16], strides = [1, 1]} : vector<32x32xf32> to vector<32x16xf32>
    %85 = vector.broadcast %76 : vector<32x1xf32> to vector<32x16xf32>
    %86 = arith.mulf %84, %85 : vector<32x16xf32>
    %87 = vector.extract_strided_slice %72 {offsets = [0, 0], sizes = [32, 16], strides = [1, 1]} : vector<32x32xf32> to vector<32x16xf32>
    %88 = arith.mulf %87, %83 : vector<32x16xf32>
    %89 = arith.mulf %87, %86 : vector<32x16xf32>
    %90 = vector.extract_strided_slice %72 {offsets = [0, 16], sizes = [32, 16], strides = [1, 1]} : vector<32x32xf32> to vector<32x16xf32>
    %91 = arith.addf %89, %90 : vector<32x16xf32>
    %92 = tpu.concatenate %88, %91 in 1 : vector<32x16xf32>, vector<32x16xf32> -> vector<32x32xf32>
    %93 = vector.extract_strided_slice %92 {offsets = [30, 0], sizes = [2, 32], strides = [1, 1]} : vector<32x32xf32> to vector<2x32xf32>
    %94 = vector.extract_strided_slice %92 {offsets = [0, 0], sizes = [30, 32], strides = [1, 1]} : vector<32x32xf32> to vector<30x32xf32>
    %95 = tpu.concatenate %93, %94 in 0 : vector<2x32xf32>, vector<30x32xf32> -> vector<32x32xf32>
    %96 = vector.extract_strided_slice %3 {offsets = [0, 1], sizes = [32, 1], strides = [1, 1]} : vector<32x4xf32> to vector<32x1xf32>
    %97 = vector.extract_strided_slice %95 {offsets = [0, 0], sizes = [32, 16], strides = [1, 1]} : vector<32x32xf32> to vector<32x16xf32>
    %98 = vector.broadcast %96 : vector<32x1xf32> to vector<32x16xf32>
    %99 = arith.mulf %97, %98 : vector<32x16xf32>
    %cst_27 = arith.constant 1.000000e+00 : f32
    %100 = vector.broadcast %cst_27 : f32 to vector<32x1xf32>
    %101 = arith.subf %100, %96 : vector<32x1xf32>
    %102 = vector.broadcast %101 : vector<32x1xf32> to vector<32x16xf32>
    %103 = arith.addf %99, %102 : vector<32x16xf32>
    %104 = vector.extract_strided_slice %95 {offsets = [0, 16], sizes = [32, 16], strides = [1, 1]} : vector<32x32xf32> to vector<32x16xf32>
    %105 = vector.broadcast %96 : vector<32x1xf32> to vector<32x16xf32>
    %106 = arith.mulf %104, %105 : vector<32x16xf32>
    %107 = vector.extract_strided_slice %92 {offsets = [0, 0], sizes = [32, 16], strides = [1, 1]} : vector<32x32xf32> to vector<32x16xf32>
    %108 = arith.mulf %107, %103 : vector<32x16xf32>
    %109 = arith.mulf %107, %106 : vector<32x16xf32>
    %110 = vector.extract_strided_slice %92 {offsets = [0, 16], sizes = [32, 16], strides = [1, 1]} : vector<32x32xf32> to vector<32x16xf32>
    %111 = arith.addf %109, %110 : vector<32x16xf32>
    %112 = tpu.concatenate %108, %111 in 1 : vector<32x16xf32>, vector<32x16xf32> -> vector<32x32xf32>
    %113 = vector.extract_strided_slice %112 {offsets = [28, 0], sizes = [4, 32], strides = [1, 1]} : vector<32x32xf32> to vector<4x32xf32>
    %114 = vector.extract_strided_slice %112 {offsets = [0, 0], sizes = [28, 32], strides = [1, 1]} : vector<32x32xf32> to vector<28x32xf32>
    %115 = tpu.concatenate %113, %114 in 0 : vector<4x32xf32>, vector<28x32xf32> -> vector<32x32xf32>
    %116 = vector.extract_strided_slice %3 {offsets = [0, 2], sizes = [32, 1], strides = [1, 1]} : vector<32x4xf32> to vector<32x1xf32>
    %117 = vector.extract_strided_slice %115 {offsets = [0, 0], sizes = [32, 16], strides = [1, 1]} : vector<32x32xf32> to vector<32x16xf32>
    %118 = vector.broadcast %116 : vector<32x1xf32> to vector<32x16xf32>
    %119 = arith.mulf %117, %118 : vector<32x16xf32>
    %cst_28 = arith.constant 1.000000e+00 : f32
    %120 = vector.broadcast %cst_28 : f32 to vector<32x1xf32>
    %121 = arith.subf %120, %116 : vector<32x1xf32>
    %122 = vector.broadcast %121 : vector<32x1xf32> to vector<32x16xf32>
    %123 = arith.addf %119, %122 : vector<32x16xf32>
    %124 = vector.extract_strided_slice %115 {offsets = [0, 16], sizes = [32, 16], strides = [1, 1]} : vector<32x32xf32> to vector<32x16xf32>
    %125 = vector.broadcast %116 : vector<32x1xf32> to vector<32x16xf32>
    %126 = arith.mulf %124, %125 : vector<32x16xf32>
    %127 = vector.extract_strided_slice %112 {offsets = [0, 0], sizes = [32, 16], strides = [1, 1]} : vector<32x32xf32> to vector<32x16xf32>
    %128 = arith.mulf %127, %123 : vector<32x16xf32>
    %129 = arith.mulf %127, %126 : vector<32x16xf32>
    %130 = vector.extract_strided_slice %112 {offsets = [0, 16], sizes = [32, 16], strides = [1, 1]} : vector<32x32xf32> to vector<32x16xf32>
    %131 = arith.addf %129, %130 : vector<32x16xf32>
    %132 = tpu.concatenate %128, %131 in 1 : vector<32x16xf32>, vector<32x16xf32> -> vector<32x32xf32>
    %133 = vector.extract_strided_slice %132 {offsets = [24, 0], sizes = [8, 32], strides = [1, 1]} : vector<32x32xf32> to vector<8x32xf32>
    %134 = vector.extract_strided_slice %132 {offsets = [0, 0], sizes = [24, 32], strides = [1, 1]} : vector<32x32xf32> to vector<24x32xf32>
    %135 = tpu.concatenate %133, %134 in 0 : vector<8x32xf32>, vector<24x32xf32> -> vector<32x32xf32>
    %136 = vector.extract_strided_slice %3 {offsets = [0, 3], sizes = [32, 1], strides = [1, 1]} : vector<32x4xf32> to vector<32x1xf32>
    %137 = vector.extract_strided_slice %135 {offsets = [0, 0], sizes = [32, 16], strides = [1, 1]} : vector<32x32xf32> to vector<32x16xf32>
    %138 = vector.broadcast %136 : vector<32x1xf32> to vector<32x16xf32>
    %139 = arith.mulf %137, %138 : vector<32x16xf32>
    %cst_29 = arith.constant 1.000000e+00 : f32
    %140 = vector.broadcast %cst_29 : f32 to vector<32x1xf32>
    %141 = arith.subf %140, %136 : vector<32x1xf32>
    %142 = vector.broadcast %141 : vector<32x1xf32> to vector<32x16xf32>
    %143 = arith.addf %139, %142 : vector<32x16xf32>
    %144 = vector.extract_strided_slice %135 {offsets = [0, 16], sizes = [32, 16], strides = [1, 1]} : vector<32x32xf32> to vector<32x16xf32>
    %145 = vector.broadcast %136 : vector<32x1xf32> to vector<32x16xf32>
    %146 = arith.mulf %144, %145 : vector<32x16xf32>
    %147 = vector.extract_strided_slice %132 {offsets = [0, 0], sizes = [32, 16], strides = [1, 1]} : vector<32x32xf32> to vector<32x16xf32>
    %148 = arith.mulf %147, %143 : vector<32x16xf32>
    %149 = arith.mulf %147, %146 : vector<32x16xf32>
    %150 = vector.extract_strided_slice %132 {offsets = [0, 16], sizes = [32, 16], strides = [1, 1]} : vector<32x32xf32> to vector<32x16xf32>
    %151 = arith.addf %149, %150 : vector<32x16xf32>
    %152 = tpu.concatenate %148, %151 in 1 : vector<32x16xf32>, vector<32x16xf32> -> vector<32x32xf32>
    %153 = vector.extract_strided_slice %152 {offsets = [0, 16], sizes = [32, 16], strides = [1, 1]} : vector<32x32xf32> to vector<32x16xf32>
    %154 = tpu.concatenate %153, %53 in 1 : vector<32x16xf32>, vector<32x32xf32> -> vector<32x48xf32>
    %cst_30 = arith.constant dense<0.000000e+00> : vector<32x128xf32>
    %155 = tpu.matmul %154, %16, %cst_30 {dimension_numbers = #tpu.dot_dimension_numbers<[1], [0], [0], [1], [0, 0, 1, 1], [], []>} : vector<32x48xf32>, vector<48x128xf32>, vector<32x128xf32> -> vector<32x128xf32>
    %156 = vector.extract_strided_slice %155 {offsets = [0, 0], sizes = [32, 32], strides = [1, 1]} : vector<32x128xf32> to vector<32x32xf32>
    %157 = vector.broadcast %29 : vector<1x32xf32> to vector<32x32xf32>
    %158 = arith.addf %156, %157 : vector<32x32xf32>
    %159 = arith.addf %12, %158 : vector<32x32xf32>
    %cst_31 = arith.constant dense<0.000000e+00> : vector<32xf32>
    %160 = vector.multi_reduction <add>, %159, %cst_31 [1] : vector<32x32xf32> to vector<32xf32>
    %161 = vector.shape_cast %160 : vector<32xf32> to vector<32x1xf32>
    %cst_32 = arith.constant 3.200000e+01 : f32
    %162 = vector.broadcast %cst_32 : f32 to vector<32x1xf32>
    %163 = arith.divf %161, %162 : vector<32x1xf32>
    %164 = vector.broadcast %163 : vector<32x1xf32> to vector<32x32xf32>
    %165 = arith.subf %159, %164 : vector<32x32xf32>
    %166 = arith.mulf %165, %165 : vector<32x32xf32>
    %cst_33 = arith.constant dense<0.000000e+00> : vector<32xf32>
    %167 = vector.multi_reduction <add>, %166, %cst_33 [1] : vector<32x32xf32> to vector<32xf32>
    %168 = vector.shape_cast %167 : vector<32xf32> to vector<32x1xf32>
    %cst_34 = arith.constant 3.200000e+01 : f32
    %169 = vector.broadcast %cst_34 : f32 to vector<32x1xf32>
    %170 = arith.divf %168, %169 : vector<32x1xf32>
    %171 = vector.broadcast %163 : vector<32x1xf32> to vector<32x32xf32>
    %172 = arith.subf %159, %171 : vector<32x32xf32>
    %cst_35 = arith.constant 9.99999974E-6 : f32
    %173 = vector.broadcast %cst_35 : f32 to vector<32x1xf32>
    %174 = arith.addf %170, %173 : vector<32x1xf32>
    %175 = math.rsqrt %174 : vector<32x1xf32>
    %176 = vector.broadcast %175 : vector<32x1xf32> to vector<32x32xf32>
    %177 = arith.mulf %172, %176 : vector<32x32xf32>
    %178 = vector.broadcast %25 : vector<1x32xf32> to vector<32x32xf32>
    %179 = arith.mulf %177, %178 : vector<32x32xf32>
    %180 = vector.broadcast %26 : vector<1x32xf32> to vector<32x32xf32>
    %181 = arith.addf %179, %180 : vector<32x32xf32>
    %cst_36 = arith.constant dense<0.000000e+00> : vector<32x128xf32>
    %182 = tpu.matmul %181, %18, %cst_36 {dimension_numbers = #tpu.dot_dimension_numbers<[1], [0], [0], [1], [0, 0, 1, 1], [], []>} : vector<32x32xf32>, vector<32x128xf32>, vector<32x128xf32> -> vector<32x128xf32>
    %183 = vector.broadcast %30 : vector<1x128xf32> to vector<32x128xf32>
    %184 = arith.addf %182, %183 : vector<32x128xf32>
    %185 = vector.extract_strided_slice %184 {offsets = [0, 0], sizes = [32, 64], strides = [1, 1]} : vector<32x128xf32> to vector<32x64xf32>
    %186 = vector.extract_strided_slice %184 {offsets = [0, 64], sizes = [32, 64], strides = [1, 1]} : vector<32x128xf32> to vector<32x64xf32>
    %187 = arith.negf %186 : vector<32x64xf32>
    %188 = math.exp %187 : vector<32x64xf32>
    %cst_37 = arith.constant 1.000000e+00 : f32
    %189 = vector.broadcast %cst_37 : f32 to vector<32x64xf32>
    %190 = arith.addf %189, %188 : vector<32x64xf32>
    %191 = arith.divf %189, %190 : vector<32x64xf32>
    %192 = arith.mulf %186, %191 : vector<32x64xf32>
    %193 = arith.mulf %185, %192 : vector<32x64xf32>
    %cst_38 = arith.constant dense<0.000000e+00> : vector<32x128xf32>
    %194 = tpu.matmul %193, %20, %cst_38 {dimension_numbers = #tpu.dot_dimension_numbers<[1], [0], [0], [1], [0, 0, 1, 1], [], []>} : vector<32x64xf32>, vector<64x128xf32>, vector<32x128xf32> -> vector<32x128xf32>
    %195 = vector.extract_strided_slice %194 {offsets = [0, 0], sizes = [32, 32], strides = [1, 1]} : vector<32x128xf32> to vector<32x32xf32>
    %196 = arith.addf %159, %195 : vector<32x32xf32>
    %197 = vector.broadcast %31 : vector<1x32xf32> to vector<32x32xf32>
    %198 = arith.addf %196, %197 : vector<32x32xf32>
    %c1 = arith.constant 1 : index
    %c0_39 = arith.constant 0 : index
    %c0_40 = arith.constant 0 : index
    %199 = vector.load %arg2[%c1, %c0_39, %c0_40] : memref<2x192x128xf32, #tpu.memory_space<vmem>>, vector<1x32x128xf32>
    %200 = vector.shape_cast %199 : vector<1x32x128xf32> to vector<32x128xf32>
    %c1_41 = arith.constant 1 : index
    %c32_42 = arith.constant 32 : index
    %c0_43 = arith.constant 0 : index
    %201 = vector.load %arg2[%c1_41, %c32_42, %c0_43] : memref<2x192x128xf32, #tpu.memory_space<vmem>>, vector<1x48x128xf32>
    %202 = vector.shape_cast %201 : vector<1x48x128xf32> to vector<48x128xf32>
    %c1_44 = arith.constant 1 : index
    %c80_45 = arith.constant 80 : index
    %c0_46 = arith.constant 0 : index
    %203 = vector.load %arg2[%c1_44, %c80_45, %c0_46] : memref<2x192x128xf32, #tpu.memory_space<vmem>>, vector<1x32x128xf32>
    %204 = vector.shape_cast %203 : vector<1x32x128xf32> to vector<32x128xf32>
    %c1_47 = arith.constant 1 : index
    %c112_48 = arith.constant 112 : index
    %c0_49 = arith.constant 0 : index
    %205 = vector.load %arg2[%c1_47, %c112_48, %c0_49] : memref<2x192x128xf32, #tpu.memory_space<vmem>>, vector<1x64x128xf32>
    %206 = vector.shape_cast %205 : vector<1x64x128xf32> to vector<64x128xf32>
    %c1_50 = arith.constant 1 : index
    %c176_51 = arith.constant 176 : index
    %c0_52 = arith.constant 0 : index
    %207 = vector.load %arg2[%c1_50, %c176_51, %c0_52] : memref<2x192x128xf32, #tpu.memory_space<vmem>>, vector<1x16x128xf32>
    %208 = vector.shape_cast %207 : vector<1x16x128xf32> to vector<16x128xf32>
    %209 = vector.extract_strided_slice %208 {offsets = [0, 0], sizes = [1, 32], strides = [1, 1]} : vector<16x128xf32> to vector<1x32xf32>
    %210 = vector.extract_strided_slice %208 {offsets = [1, 0], sizes = [1, 32], strides = [1, 1]} : vector<16x128xf32> to vector<1x32xf32>
    %211 = vector.extract_strided_slice %208 {offsets = [2, 0], sizes = [1, 32], strides = [1, 1]} : vector<16x128xf32> to vector<1x32xf32>
    %212 = vector.extract_strided_slice %208 {offsets = [3, 0], sizes = [1, 32], strides = [1, 1]} : vector<16x128xf32> to vector<1x32xf32>
    %213 = vector.extract_strided_slice %208 {offsets = [4, 0], sizes = [1, 16], strides = [1, 1]} : vector<16x128xf32> to vector<1x16xf32>
    %214 = vector.extract_strided_slice %208 {offsets = [5, 0], sizes = [1, 128], strides = [1, 1]} : vector<16x128xf32> to vector<1x128xf32>
    %215 = vector.extract_strided_slice %208 {offsets = [6, 0], sizes = [1, 32], strides = [1, 1]} : vector<16x128xf32> to vector<1x32xf32>
    %216 = vector.extract_strided_slice %208 {offsets = [7, 0], sizes = [1, 128], strides = [1, 1]} : vector<16x128xf32> to vector<1x128xf32>
    %217 = vector.extract_strided_slice %208 {offsets = [8, 0], sizes = [1, 32], strides = [1, 1]} : vector<16x128xf32> to vector<1x32xf32>
    %cst_53 = arith.constant dense<0.000000e+00> : vector<32xf32>
    %218 = vector.multi_reduction <add>, %198, %cst_53 [1] : vector<32x32xf32> to vector<32xf32>
    %219 = vector.shape_cast %218 : vector<32xf32> to vector<32x1xf32>
    %cst_54 = arith.constant 3.200000e+01 : f32
    %220 = vector.broadcast %cst_54 : f32 to vector<32x1xf32>
    %221 = arith.divf %219, %220 : vector<32x1xf32>
    %222 = vector.broadcast %221 : vector<32x1xf32> to vector<32x32xf32>
    %223 = arith.subf %198, %222 : vector<32x32xf32>
    %224 = arith.mulf %223, %223 : vector<32x32xf32>
    %cst_55 = arith.constant dense<0.000000e+00> : vector<32xf32>
    %225 = vector.multi_reduction <add>, %224, %cst_55 [1] : vector<32x32xf32> to vector<32xf32>
    %226 = vector.shape_cast %225 : vector<32xf32> to vector<32x1xf32>
    %cst_56 = arith.constant 3.200000e+01 : f32
    %227 = vector.broadcast %cst_56 : f32 to vector<32x1xf32>
    %228 = arith.divf %226, %227 : vector<32x1xf32>
    %229 = vector.broadcast %221 : vector<32x1xf32> to vector<32x32xf32>
    %230 = arith.subf %198, %229 : vector<32x32xf32>
    %cst_57 = arith.constant 9.99999974E-6 : f32
    %231 = vector.broadcast %cst_57 : f32 to vector<32x1xf32>
    %232 = arith.addf %228, %231 : vector<32x1xf32>
    %233 = math.rsqrt %232 : vector<32x1xf32>
    %234 = vector.broadcast %233 : vector<32x1xf32> to vector<32x32xf32>
    %235 = arith.mulf %230, %234 : vector<32x32xf32>
    %236 = vector.broadcast %209 : vector<1x32xf32> to vector<32x32xf32>
    %237 = arith.mulf %235, %236 : vector<32x32xf32>
    %238 = vector.broadcast %210 : vector<1x32xf32> to vector<32x32xf32>
    %239 = arith.addf %237, %238 : vector<32x32xf32>
    %cst_58 = arith.constant dense<0.000000e+00> : vector<32x128xf32>
    %240 = tpu.matmul %239, %200, %cst_58 {dimension_numbers = #tpu.dot_dimension_numbers<[1], [0], [0], [1], [0, 0, 1, 1], [], []>} : vector<32x32xf32>, vector<32x128xf32>, vector<32x128xf32> -> vector<32x128xf32>
    %241 = vector.broadcast %214 : vector<1x128xf32> to vector<32x128xf32>
    %242 = arith.addf %240, %241 : vector<32x128xf32>
    %243 = vector.extract_strided_slice %242 {offsets = [0, 0], sizes = [32, 16], strides = [1, 1]} : vector<32x128xf32> to vector<32x16xf32>
    %244 = vector.extract_strided_slice %242 {offsets = [0, 16], sizes = [32, 1], strides = [1, 1]} : vector<32x128xf32> to vector<32x1xf32>
    %245 = arith.negf %244 : vector<32x1xf32>
    %246 = math.exp %245 : vector<32x1xf32>
    %cst_59 = arith.constant 1.000000e+00 : f32
    %247 = vector.broadcast %cst_59 : f32 to vector<32x1xf32>
    %248 = arith.addf %247, %246 : vector<32x1xf32>
    %249 = arith.divf %247, %248 : vector<32x1xf32>
    %cst_60 = arith.constant 9.900000e-01 : f32
    %250 = vector.broadcast %cst_60 : f32 to vector<32x1xf32>
    %251 = arith.mulf %249, %250 : vector<32x1xf32>
    %cst_61 = arith.constant 0.00999999977 : f32
    %252 = vector.broadcast %cst_61 : f32 to vector<32x1xf32>
    %253 = arith.addf %251, %252 : vector<32x1xf32>
    %254 = vector.broadcast %213 : vector<1x16xf32> to vector<32x16xf32>
    %255 = vector.broadcast %253 : vector<32x1xf32> to vector<32x16xf32>
    %256 = arith.mulf %254, %255 : vector<32x16xf32>
    %257 = math.exp %256 : vector<32x16xf32>
    %258 = tpu.concatenate %257, %243 in 1 : vector<32x16xf32>, vector<32x16xf32> -> vector<32x32xf32>
    %259 = vector.extract_strided_slice %258 {offsets = [31, 0], sizes = [1, 32], strides = [1, 1]} : vector<32x32xf32> to vector<1x32xf32>
    %260 = vector.extract_strided_slice %258 {offsets = [0, 0], sizes = [31, 32], strides = [1, 1]} : vector<32x32xf32> to vector<31x32xf32>
    %261 = tpu.concatenate %259, %260 in 0 : vector<1x32xf32>, vector<31x32xf32> -> vector<32x32xf32>
    %262 = vector.extract_strided_slice %3 {offsets = [0, 0], sizes = [32, 1], strides = [1, 1]} : vector<32x4xf32> to vector<32x1xf32>
    %263 = vector.extract_strided_slice %261 {offsets = [0, 0], sizes = [32, 16], strides = [1, 1]} : vector<32x32xf32> to vector<32x16xf32>
    %264 = vector.broadcast %262 : vector<32x1xf32> to vector<32x16xf32>
    %265 = arith.mulf %263, %264 : vector<32x16xf32>
    %cst_62 = arith.constant 1.000000e+00 : f32
    %266 = vector.broadcast %cst_62 : f32 to vector<32x1xf32>
    %267 = arith.subf %266, %262 : vector<32x1xf32>
    %268 = vector.broadcast %267 : vector<32x1xf32> to vector<32x16xf32>
    %269 = arith.addf %265, %268 : vector<32x16xf32>
    %270 = vector.extract_strided_slice %261 {offsets = [0, 16], sizes = [32, 16], strides = [1, 1]} : vector<32x32xf32> to vector<32x16xf32>
    %271 = vector.broadcast %262 : vector<32x1xf32> to vector<32x16xf32>
    %272 = arith.mulf %270, %271 : vector<32x16xf32>
    %273 = vector.extract_strided_slice %258 {offsets = [0, 0], sizes = [32, 16], strides = [1, 1]} : vector<32x32xf32> to vector<32x16xf32>
    %274 = arith.mulf %273, %269 : vector<32x16xf32>
    %275 = arith.mulf %273, %272 : vector<32x16xf32>
    %276 = vector.extract_strided_slice %258 {offsets = [0, 16], sizes = [32, 16], strides = [1, 1]} : vector<32x32xf32> to vector<32x16xf32>
    %277 = arith.addf %275, %276 : vector<32x16xf32>
    %278 = tpu.concatenate %274, %277 in 1 : vector<32x16xf32>, vector<32x16xf32> -> vector<32x32xf32>
    %279 = vector.extract_strided_slice %278 {offsets = [30, 0], sizes = [2, 32], strides = [1, 1]} : vector<32x32xf32> to vector<2x32xf32>
    %280 = vector.extract_strided_slice %278 {offsets = [0, 0], sizes = [30, 32], strides = [1, 1]} : vector<32x32xf32> to vector<30x32xf32>
    %281 = tpu.concatenate %279, %280 in 0 : vector<2x32xf32>, vector<30x32xf32> -> vector<32x32xf32>
    %282 = vector.extract_strided_slice %3 {offsets = [0, 1], sizes = [32, 1], strides = [1, 1]} : vector<32x4xf32> to vector<32x1xf32>
    %283 = vector.extract_strided_slice %281 {offsets = [0, 0], sizes = [32, 16], strides = [1, 1]} : vector<32x32xf32> to vector<32x16xf32>
    %284 = vector.broadcast %282 : vector<32x1xf32> to vector<32x16xf32>
    %285 = arith.mulf %283, %284 : vector<32x16xf32>
    %cst_63 = arith.constant 1.000000e+00 : f32
    %286 = vector.broadcast %cst_63 : f32 to vector<32x1xf32>
    %287 = arith.subf %286, %282 : vector<32x1xf32>
    %288 = vector.broadcast %287 : vector<32x1xf32> to vector<32x16xf32>
    %289 = arith.addf %285, %288 : vector<32x16xf32>
    %290 = vector.extract_strided_slice %281 {offsets = [0, 16], sizes = [32, 16], strides = [1, 1]} : vector<32x32xf32> to vector<32x16xf32>
    %291 = vector.broadcast %282 : vector<32x1xf32> to vector<32x16xf32>
    %292 = arith.mulf %290, %291 : vector<32x16xf32>
    %293 = vector.extract_strided_slice %278 {offsets = [0, 0], sizes = [32, 16], strides = [1, 1]} : vector<32x32xf32> to vector<32x16xf32>
    %294 = arith.mulf %293, %289 : vector<32x16xf32>
    %295 = arith.mulf %293, %292 : vector<32x16xf32>
    %296 = vector.extract_strided_slice %278 {offsets = [0, 16], sizes = [32, 16], strides = [1, 1]} : vector<32x32xf32> to vector<32x16xf32>
    %297 = arith.addf %295, %296 : vector<32x16xf32>
    %298 = tpu.concatenate %294, %297 in 1 : vector<32x16xf32>, vector<32x16xf32> -> vector<32x32xf32>
    %299 = vector.extract_strided_slice %298 {offsets = [28, 0], sizes = [4, 32], strides = [1, 1]} : vector<32x32xf32> to vector<4x32xf32>
    %300 = vector.extract_strided_slice %298 {offsets = [0, 0], sizes = [28, 32], strides = [1, 1]} : vector<32x32xf32> to vector<28x32xf32>
    %301 = tpu.concatenate %299, %300 in 0 : vector<4x32xf32>, vector<28x32xf32> -> vector<32x32xf32>
    %302 = vector.extract_strided_slice %3 {offsets = [0, 2], sizes = [32, 1], strides = [1, 1]} : vector<32x4xf32> to vector<32x1xf32>
    %303 = vector.extract_strided_slice %301 {offsets = [0, 0], sizes = [32, 16], strides = [1, 1]} : vector<32x32xf32> to vector<32x16xf32>
    %304 = vector.broadcast %302 : vector<32x1xf32> to vector<32x16xf32>
    %305 = arith.mulf %303, %304 : vector<32x16xf32>
    %cst_64 = arith.constant 1.000000e+00 : f32
    %306 = vector.broadcast %cst_64 : f32 to vector<32x1xf32>
    %307 = arith.subf %306, %302 : vector<32x1xf32>
    %308 = vector.broadcast %307 : vector<32x1xf32> to vector<32x16xf32>
    %309 = arith.addf %305, %308 : vector<32x16xf32>
    %310 = vector.extract_strided_slice %301 {offsets = [0, 16], sizes = [32, 16], strides = [1, 1]} : vector<32x32xf32> to vector<32x16xf32>
    %311 = vector.broadcast %302 : vector<32x1xf32> to vector<32x16xf32>
    %312 = arith.mulf %310, %311 : vector<32x16xf32>
    %313 = vector.extract_strided_slice %298 {offsets = [0, 0], sizes = [32, 16], strides = [1, 1]} : vector<32x32xf32> to vector<32x16xf32>
    %314 = arith.mulf %313, %309 : vector<32x16xf32>
    %315 = arith.mulf %313, %312 : vector<32x16xf32>
    %316 = vector.extract_strided_slice %298 {offsets = [0, 16], sizes = [32, 16], strides = [1, 1]} : vector<32x32xf32> to vector<32x16xf32>
    %317 = arith.addf %315, %316 : vector<32x16xf32>
    %318 = tpu.concatenate %314, %317 in 1 : vector<32x16xf32>, vector<32x16xf32> -> vector<32x32xf32>
    %319 = vector.extract_strided_slice %318 {offsets = [24, 0], sizes = [8, 32], strides = [1, 1]} : vector<32x32xf32> to vector<8x32xf32>
    %320 = vector.extract_strided_slice %318 {offsets = [0, 0], sizes = [24, 32], strides = [1, 1]} : vector<32x32xf32> to vector<24x32xf32>
    %321 = tpu.concatenate %319, %320 in 0 : vector<8x32xf32>, vector<24x32xf32> -> vector<32x32xf32>
    %322 = vector.extract_strided_slice %3 {offsets = [0, 3], sizes = [32, 1], strides = [1, 1]} : vector<32x4xf32> to vector<32x1xf32>
    %323 = vector.extract_strided_slice %321 {offsets = [0, 0], sizes = [32, 16], strides = [1, 1]} : vector<32x32xf32> to vector<32x16xf32>
    %324 = vector.broadcast %322 : vector<32x1xf32> to vector<32x16xf32>
    %325 = arith.mulf %323, %324 : vector<32x16xf32>
    %cst_65 = arith.constant 1.000000e+00 : f32
    %326 = vector.broadcast %cst_65 : f32 to vector<32x1xf32>
    %327 = arith.subf %326, %322 : vector<32x1xf32>
    %328 = vector.broadcast %327 : vector<32x1xf32> to vector<32x16xf32>
    %329 = arith.addf %325, %328 : vector<32x16xf32>
    %330 = vector.extract_strided_slice %321 {offsets = [0, 16], sizes = [32, 16], strides = [1, 1]} : vector<32x32xf32> to vector<32x16xf32>
    %331 = vector.broadcast %322 : vector<32x1xf32> to vector<32x16xf32>
    %332 = arith.mulf %330, %331 : vector<32x16xf32>
    %333 = vector.extract_strided_slice %318 {offsets = [0, 0], sizes = [32, 16], strides = [1, 1]} : vector<32x32xf32> to vector<32x16xf32>
    %334 = arith.mulf %333, %329 : vector<32x16xf32>
    %335 = arith.mulf %333, %332 : vector<32x16xf32>
    %336 = vector.extract_strided_slice %318 {offsets = [0, 16], sizes = [32, 16], strides = [1, 1]} : vector<32x32xf32> to vector<32x16xf32>
    %337 = arith.addf %335, %336 : vector<32x16xf32>
    %338 = tpu.concatenate %334, %337 in 1 : vector<32x16xf32>, vector<32x16xf32> -> vector<32x32xf32>
    %339 = vector.extract_strided_slice %338 {offsets = [0, 16], sizes = [32, 16], strides = [1, 1]} : vector<32x32xf32> to vector<32x16xf32>
    %340 = tpu.concatenate %339, %239 in 1 : vector<32x16xf32>, vector<32x32xf32> -> vector<32x48xf32>
    %cst_66 = arith.constant dense<0.000000e+00> : vector<32x128xf32>
    %341 = tpu.matmul %340, %202, %cst_66 {dimension_numbers = #tpu.dot_dimension_numbers<[1], [0], [0], [1], [0, 0, 1, 1], [], []>} : vector<32x48xf32>, vector<48x128xf32>, vector<32x128xf32> -> vector<32x128xf32>
    %342 = vector.extract_strided_slice %341 {offsets = [0, 0], sizes = [32, 32], strides = [1, 1]} : vector<32x128xf32> to vector<32x32xf32>
    %343 = vector.broadcast %215 : vector<1x32xf32> to vector<32x32xf32>
    %344 = arith.addf %342, %343 : vector<32x32xf32>
    %345 = arith.addf %198, %344 : vector<32x32xf32>
    %cst_67 = arith.constant dense<0.000000e+00> : vector<32xf32>
    %346 = vector.multi_reduction <add>, %345, %cst_67 [1] : vector<32x32xf32> to vector<32xf32>
    %347 = vector.shape_cast %346 : vector<32xf32> to vector<32x1xf32>
    %cst_68 = arith.constant 3.200000e+01 : f32
    %348 = vector.broadcast %cst_68 : f32 to vector<32x1xf32>
    %349 = arith.divf %347, %348 : vector<32x1xf32>
    %350 = vector.broadcast %349 : vector<32x1xf32> to vector<32x32xf32>
    %351 = arith.subf %345, %350 : vector<32x32xf32>
    %352 = arith.mulf %351, %351 : vector<32x32xf32>
    %cst_69 = arith.constant dense<0.000000e+00> : vector<32xf32>
    %353 = vector.multi_reduction <add>, %352, %cst_69 [1] : vector<32x32xf32> to vector<32xf32>
    %354 = vector.shape_cast %353 : vector<32xf32> to vector<32x1xf32>
    %cst_70 = arith.constant 3.200000e+01 : f32
    %355 = vector.broadcast %cst_70 : f32 to vector<32x1xf32>
    %356 = arith.divf %354, %355 : vector<32x1xf32>
    %357 = vector.broadcast %349 : vector<32x1xf32> to vector<32x32xf32>
    %358 = arith.subf %345, %357 : vector<32x32xf32>
    %cst_71 = arith.constant 9.99999974E-6 : f32
    %359 = vector.broadcast %cst_71 : f32 to vector<32x1xf32>
    %360 = arith.addf %356, %359 : vector<32x1xf32>
    %361 = math.rsqrt %360 : vector<32x1xf32>
    %362 = vector.broadcast %361 : vector<32x1xf32> to vector<32x32xf32>
    %363 = arith.mulf %358, %362 : vector<32x32xf32>
    %364 = vector.broadcast %211 : vector<1x32xf32> to vector<32x32xf32>
    %365 = arith.mulf %363, %364 : vector<32x32xf32>
    %366 = vector.broadcast %212 : vector<1x32xf32> to vector<32x32xf32>
    %367 = arith.addf %365, %366 : vector<32x32xf32>
    %cst_72 = arith.constant dense<0.000000e+00> : vector<32x128xf32>
    %368 = tpu.matmul %367, %204, %cst_72 {dimension_numbers = #tpu.dot_dimension_numbers<[1], [0], [0], [1], [0, 0, 1, 1], [], []>} : vector<32x32xf32>, vector<32x128xf32>, vector<32x128xf32> -> vector<32x128xf32>
    %369 = vector.broadcast %216 : vector<1x128xf32> to vector<32x128xf32>
    %370 = arith.addf %368, %369 : vector<32x128xf32>
    %371 = vector.extract_strided_slice %370 {offsets = [0, 0], sizes = [32, 64], strides = [1, 1]} : vector<32x128xf32> to vector<32x64xf32>
    %372 = vector.extract_strided_slice %370 {offsets = [0, 64], sizes = [32, 64], strides = [1, 1]} : vector<32x128xf32> to vector<32x64xf32>
    %373 = arith.negf %372 : vector<32x64xf32>
    %374 = math.exp %373 : vector<32x64xf32>
    %cst_73 = arith.constant 1.000000e+00 : f32
    %375 = vector.broadcast %cst_73 : f32 to vector<32x64xf32>
    %376 = arith.addf %375, %374 : vector<32x64xf32>
    %377 = arith.divf %375, %376 : vector<32x64xf32>
    %378 = arith.mulf %372, %377 : vector<32x64xf32>
    %379 = arith.mulf %371, %378 : vector<32x64xf32>
    %cst_74 = arith.constant dense<0.000000e+00> : vector<32x128xf32>
    %380 = tpu.matmul %379, %206, %cst_74 {dimension_numbers = #tpu.dot_dimension_numbers<[1], [0], [0], [1], [0, 0, 1, 1], [], []>} : vector<32x64xf32>, vector<64x128xf32>, vector<32x128xf32> -> vector<32x128xf32>
    %381 = vector.extract_strided_slice %380 {offsets = [0, 0], sizes = [32, 32], strides = [1, 1]} : vector<32x128xf32> to vector<32x32xf32>
    %382 = arith.addf %345, %381 : vector<32x32xf32>
    %383 = vector.broadcast %217 : vector<1x32xf32> to vector<32x32xf32>
    %384 = arith.addf %382, %383 : vector<32x32xf32>
    %cst_75 = arith.constant dense<0.000000e+00> : vector<32xf32>
    %385 = vector.multi_reduction <add>, %384, %cst_75 [1] : vector<32x32xf32> to vector<32xf32>
    %386 = vector.shape_cast %385 : vector<32xf32> to vector<32x1xf32>
    %cst_76 = arith.constant 3.200000e+01 : f32
    %387 = vector.broadcast %cst_76 : f32 to vector<32x1xf32>
    %388 = arith.divf %386, %387 : vector<32x1xf32>
    %389 = vector.broadcast %388 : vector<32x1xf32> to vector<32x32xf32>
    %390 = arith.subf %384, %389 : vector<32x32xf32>
    %391 = arith.mulf %390, %390 : vector<32x32xf32>
    %cst_77 = arith.constant dense<0.000000e+00> : vector<32xf32>
    %392 = vector.multi_reduction <add>, %391, %cst_77 [1] : vector<32x32xf32> to vector<32xf32>
    %393 = vector.shape_cast %392 : vector<32xf32> to vector<32x1xf32>
    %cst_78 = arith.constant 3.200000e+01 : f32
    %394 = vector.broadcast %cst_78 : f32 to vector<32x1xf32>
    %395 = arith.divf %393, %394 : vector<32x1xf32>
    %396 = vector.broadcast %388 : vector<32x1xf32> to vector<32x32xf32>
    %397 = arith.subf %384, %396 : vector<32x32xf32>
    %cst_79 = arith.constant 9.99999974E-6 : f32
    %398 = vector.broadcast %cst_79 : f32 to vector<32x1xf32>
    %399 = arith.addf %395, %398 : vector<32x1xf32>
    %400 = math.rsqrt %399 : vector<32x1xf32>
    %401 = vector.broadcast %400 : vector<32x1xf32> to vector<32x32xf32>
    %402 = arith.mulf %397, %401 : vector<32x32xf32>
    %403 = vector.broadcast %6 : vector<1x32xf32> to vector<32x32xf32>
    %404 = arith.mulf %402, %403 : vector<32x32xf32>
    %405 = vector.broadcast %7 : vector<1x32xf32> to vector<32x32xf32>
    %406 = arith.addf %404, %405 : vector<32x32xf32>
    %407 = vector.extract_strided_slice %406 {offsets = [0, 0], sizes = [16, 32], strides = [1, 1]} : vector<32x32xf32> to vector<16x32xf32>
    %cst_80 = arith.constant dense<0.000000e+00> : vector<32xf32>
    %408 = vector.multi_reduction <add>, %407, %cst_80 [0] : vector<16x32xf32> to vector<32xf32>
    %409 = vector.shape_cast %408 : vector<32xf32> to vector<1x32xf32>
    %cst_81 = arith.constant 1.600000e+01 : f32
    %410 = vector.broadcast %cst_81 : f32 to vector<1x32xf32>
    %411 = arith.divf %409, %410 : vector<1x32xf32>
    %412 = vector.extract_strided_slice %406 {offsets = [16, 0], sizes = [16, 32], strides = [1, 1]} : vector<32x32xf32> to vector<16x32xf32>
    %cst_82 = arith.constant dense<0.000000e+00> : vector<32xf32>
    %413 = vector.multi_reduction <add>, %412, %cst_82 [0] : vector<16x32xf32> to vector<32xf32>
    %414 = vector.shape_cast %413 : vector<32xf32> to vector<1x32xf32>
    %cst_83 = arith.constant 1.600000e+01 : f32
    %415 = vector.broadcast %cst_83 : f32 to vector<1x32xf32>
    %416 = arith.divf %414, %415 : vector<1x32xf32>
    %417 = tpu.concatenate %411, %416 in 0 : vector<1x32xf32>, vector<1x32xf32> -> vector<2x32xf32>
    %cst_84 = arith.constant dense<0.000000e+00> : vector<2x128xf32>
    %418 = tpu.matmul %417, %4, %cst_84 {dimension_numbers = #tpu.dot_dimension_numbers<[1], [0], [0], [1], [0, 0, 1, 1], [], []>} : vector<2x32xf32>, vector<32x128xf32>, vector<2x128xf32> -> vector<2x128xf32>
    %419 = vector.broadcast %8 : vector<1x128xf32> to vector<2x128xf32>
    %420 = arith.addf %418, %419 : vector<2x128xf32>
    %c0_85 = arith.constant 0 : index
    %c0_86 = arith.constant 0 : index
    %421 = vector.load %arg3[%c0_85, %c0_86] : memref<2x128xf32, #tpu.memory_space<vmem>>, vector<2x128xf32>
    tpu.vector_store %arg3[%c0_85, %c0_86], %420 {strides = array<i32>} : memref<2x128xf32, #tpu.memory_space<vmem>>, vector<2x128xf32>,
    return
  }
}

</mosaic_0001>

<llo_original>
// kernel: mamba_classifier_forward.1
$region0: #{mamba_classifier_forward.1}
  #allocation0 [shape = 'u32[]', space=smem, size = 0x4, offset = 0x4, fixed_abs, tag = 'smem constant byte address 0x4 - core index']
  #allocation1 [shape = 'u32[144,128]{1,0:T(1,128)}', space=vmem, size = 0x12000, scoped, tag = 'internal scratch']
  %s0 = inlined_call_operand.vmem [shape: f32[32,64], index: 0, kind: input, shape index: {}]
  %s1 = inlined_call_operand.vmem [shape: f32[136,128], index: 1, kind: input, shape index: {}]
  %s2 = inlined_call_operand.vmem [shape: f32[2,192,128], index: 2, kind: input, shape index: {}]
  %s3 = inlined_call_operand.hbm [shape: f32[2,128], index: 3, kind: output, shape index: {}]
  %s4 = sld [smem:[#allocation0]]
  $region22: #{mamba_classifier_forward.1} parent=0
    _
  %s6 = ssub.s32 1, %s4
  %s7 = scalar_select 0, %s6, %s4
  $region1: #{mamba_classifier_forward.1} parent=0
    #allocation2 [shape = 'u8[1024]{0}', space=vmem, size = 0x400, scoped, tag = 'output window, operand 0, single buffered']
    #allocation3 [shape = 's32[1]{0}', space=sflag, size = 0x4, scoped, tag = 'scoped memory for mamba_classifier_forward.1']
    %8 = vsyncpa [#allocation3], 0
    // Predicated region
    $region2: #{mamba_classifier_forward.1} parent=1 // pred_check
      _
    $region3: #{mamba_classifier_forward.1} parent=1 // pred_check_branch
      %10 = sbr.rel (0) target = $region5
    $region4: #{mamba_classifier_forward.1} parent=1 // pred_region
      _
    $region5: #{mamba_classifier_forward.1} parent=1 // pred_fallthru
      _
    // Predicated region
    $region6: #{mamba_classifier_forward.1} parent=1 // pred_check
      _
    $region7: #{mamba_classifier_forward.1} parent=1 // pred_check_branch
      %12 = sbr.rel (0) target = $region9
    $region8: #{mamba_classifier_forward.1} parent=1 // pred_region
      _
    $region9: #{mamba_classifier_forward.1} parent=1 // pred_fallthru
      _
    // Predicated region
    $region10: #{mamba_classifier_forward.1} parent=1 // pred_check
      _
    $region11: #{mamba_classifier_forward.1} parent=1 // pred_check_branch
      %14 = sbr.rel (0) target = $region13
    $region12: #{mamba_classifier_forward.1} parent=1 // pred_region
      _
    $region13: #{mamba_classifier_forward.1} parent=1 // pred_fallthru
      _
    %v15 = vld [vmem:[%s1] sm:$0xff]
    %v16 = vld [vmem:[%s1 + $0x8] sm:$0xff]
    %v17 = vld [vmem:[%s1 + $0x10] sm:$0xff]
    %v18 = vld [vmem:[%s1 + $0x18] sm:$0xff]
    %v19 = vld [vmem:[%s1 + $0x20] sm:$0xff]
    %v20 = vld [vmem:[%s1 + $0x28] sm:$0xff]
    %v21 = vld [vmem:[%s1 + $0x30] sm:$0xff]
    %v22 = vld [vmem:[%s1 + $0x38] sm:$0xff]
    %v23 = vld [vmem:[%s1 + $0x40] sm:$0xff]
    %v24 = vld [vmem:[%s1 + $0x48] sm:$0xff]
    %v25 = vld [vmem:[%s1 + $0x50] sm:$0xff]
    %v26 = vld [vmem:[%s1 + $0x58] sm:$0xff]
    %v27 = vld [vmem:[%s1 + $0x60] sm:$0xff]
    %v28 = vld [vmem:[%s1 + $0x68] sm:$0xff]
    %v29 = vld [vmem:[%s1 + $0x70] sm:$0xff]
    %v30 = vld [vmem:[%s1 + $0x78] sm:$0xff]
    %v31 = vld [vmem:[%s1 + $0x80] sm:$0xff]
    %v32 = vld [vmem:[%s0] sm:$0xff]
    %v33 = vld [vmem:[%s0 + $0x8] sm:$0xff]
    %v34 = vld [vmem:[%s0 + $0x10] sm:$0xff]
    %v35 = vld [vmem:[%s0 + $0x18] sm:$0xff]
    %vm36 = vcmask 523264
    %v38 = vsel %vm36, %v32, 0
    %v41 = vsel %vm36, %v33, 0
    %v44 = vsel %vm36, %v34, 0
    %v47 = vsel %vm36, %v35, 0
    %49 = vmatprep.subr.mxu0 0.0
    %50 = vmatpush1.msra.mxu0 %v15
    %51 = vmatprep.subr.mxu0 0.0
    %52 = vmatpush1.msra.mxu0 %v16
    %53 = vmatprep.subr.mxu0 0.0
    %54 = vmatpush1.msra.mxu0 %v17
    %55 = vmatprep.subr.mxu0 0.0
    %56 = vmatpush1.msra.mxu0 %v18
    %57 = vmatprep.subr.mxu0 0.0
    %58 = vmatpush1.msra.mxu0 %v19
    %59 = vmatprep.subr.mxu0 0.0
    %60 = vmatpush1.msra.mxu0 %v20
    %61 = vmatprep.subr.mxu0 0.0
    %62 = vmatpush1.msra.mxu0 %v21
    %63 = vmatprep.subr.mxu0 0.0
    %64 = vmatpush1.msra.mxu0 %v22
    %65 = vmatprep.subr.mxu0 0.0
    %66 = vmatpush1.msra.mxu0 0.0
    %67 = vmatprep.subr.mxu0 0.0
    %68 = vmatpush1.msra.mxu0 0.0
    %69 = vmatprep.subr.mxu0 0.0
    %70 = vmatpush1.msra.mxu0 0.0
    %71 = vmatprep.subr.mxu0 0.0
    %72 = vmatpush1.msra.mxu0 0.0
    %73 = vmatprep.subr.mxu0 0.0
    %74 = vmatpush1.msra.mxu0 0.0
    %75 = vmatprep.subr.mxu0 0.0
    %76 = vmatpush1.msra.mxu0 0.0
    %77 = vmatprep.subr.mxu0 0.0
    %78 = vmatpush1.msra.mxu0 0.0
    %79 = vmatprep.subr.mxu0 0.0
    %80 = vmatpush1.msra.mxu0 0.0
    %81 = vmatprep.subr.mxu0 0.0
    %82 = vmatpush1.msra.mxu0 0.0
    %83 = vmatprep.subr.mxu0 0.0
    %84 = vmatpush1.msra.mxu0 0.0
    %85 = vmatprep.subr.mxu0 0.0
    %86 = vmatpush1.msra.mxu0 0.0
    %87 = vmatprep.subr.mxu0 0.0
    %88 = vmatpush1.msra.mxu0 0.0
    %89 = vmatprep.subr.mxu0 0.0
    %90 = vmatpush1.msra.mxu0 0.0
    %91 = vmatprep.subr.mxu0 0.0
    %92 = vmatpush1.msra.mxu0 0.0
    %93 = vmatprep.subr.mxu0 0.0
    %94 = vmatpush1.msra.mxu0 0.0
    %95 = vmatprep.subr.mxu0 0.0
    %96 = vmatpush1.msra.mxu0 0.0
    %97 = vmatprep.subr.mxu0 0.0
    %98 = vmatpush1.msra.mxu0 0.0
    %99 = vmatprep.subr.mxu0 0.0
    %100 = vmatpush1.msra.mxu0 0.0
    %101 = vmatprep.subr.mxu0 0.0
    %102 = vmatpush1.msra.mxu0 0.0
    %103 = vmatprep.subr.mxu0 0.0
    %104 = vmatpush1.msra.mxu0 0.0
    %105 = vmatprep.subr.mxu0 0.0
    %106 = vmatpush1.msra.mxu0 0.0
    %107 = vmatprep.subr.mxu0 0.0
    %108 = vmatpush1.msra.mxu0 0.0
    %109 = vmatprep.subr.mxu0 0.0
    %110 = vmatpush1.msra.mxu0 0.0
    %111 = vmatprep.subr.mxu0 0.0
    %112 = vmatpush1.msra.mxu0 0.0
    %113 = vmatprep.mubr.f32.mxu0 0.0
    %114 = vmatmul.mubr.f32.gmra.mrb[0].mxu0 %v38
    %v115 = vpop.f32.mrb[0].mxu0
    %v116 = vadd.f32 0.0, %v115
    %v117 = vpop.f32.mrb[0].mxu0
    %118 = vmatprep.mubr.f32.mxu0 0.0
    %119 = vmatmul.mubr.f32.gmra.mrb[0].mxu0 %v41
    %v120 = vpop.f32.mrb[0].mxu0
    %v121 = vadd.f32 0.0, %v120
    %v122 = vpop.f32.mrb[0].mxu0
    %123 = vmatprep.mubr.f32.mxu0 0.0
    %124 = vmatmul.mubr.f32.gmra.mrb[0].mxu0 %v44
    %v125 = vpop.f32.mrb[0].mxu0
    %v126 = vadd.f32 0.0, %v125
    %v127 = vpop.f32.mrb[0].mxu0
    %128 = vmatprep.mubr.f32.mxu0 0.0
    %129 = vmatmul.mubr.f32.gmra.mrb[0].mxu0 %v47
    %v130 = vpop.f32.mrb[0].mxu0
    %v131 = vadd.f32 0.0, %v130
    %v132 = vpop.f32.mrb[0].mxu0
    %133 = vdwg.mxu0
    %v134 = vadd.f32 %v116, %v23
    %v135 = vadd.f32 %v121, %v24
    %v136 = vadd.f32 %v126, %v25
    %v137 = vadd.f32 %v131, %v26
    %v138 = vld [vmem:[%s2] sm:$0xff]
    %v139 = vld [vmem:[%s2 + $0x8] sm:$0xff]
    %v140 = vld [vmem:[%s2 + $0x10] sm:$0xff]
    %v141 = vld [vmem:[%s2 + $0x18] sm:$0xff]
    %v142 = vld [vmem:[%s2 + $0x20] sm:$0xff]
    %v143 = vld [vmem:[%s2 + $0x28] sm:$0xff]
    %v144 = vld [vmem:[%s2 + $0x30] sm:$0xff]
    %v145 = vld [vmem:[%s2 + $0x38] sm:$0xff]
    %v146 = vld [vmem:[%s2 + $0x40] sm:$0xff]
    %v147 = vld [vmem:[%s2 + $0x48] sm:$0xff]
    %v148 = vld [vmem:[%s2 + $0x50] sm:$0xff]
    %v149 = vld [vmem:[%s2 + $0x58] sm:$0xff]
    %v150 = vld [vmem:[%s2 + $0x60] sm:$0xff]
    %v151 = vld [vmem:[%s2 + $0x68] sm:$0xff]
    %v152 = vld [vmem:[%s2 + $0x70] sm:$0xff]
    %v153 = vld [vmem:[%s2 + $0x78] sm:$0xff]
    %v154 = vld [vmem:[%s2 + $0x80] sm:$0xff]
    %v155 = vld [vmem:[%s2 + $0x88] sm:$0xff]
    %v156 = vld [vmem:[%s2 + $0x90] sm:$0xff]
    %v157 = vld [vmem:[%s2 + $0x98] sm:$0xff]
    %v158 = vld [vmem:[%s2 + $0xa0] sm:$0xff]
    %v159 = vld [vmem:[%s2 + $0xa8] sm:$0xff]
    %v160 = vld [vmem:[%s2 + $0xb0] sm:$0xff]
    %v161 = vld [vmem:[%s2 + $0xb8] sm:$0xff]
    %vm162 = vcmask 261120
    %v163 = vsel %vm162, %v134, 0.0
    %164 = vadd.xlane.f32.xlu0 %v163
    %v165 = vpop.xlane.xlu0 %164
    %v166 = vsel %vm162, %v135, 0.0
    %167 = vadd.xlane.f32.xlu0 %v166
    %v168 = vpop.xlane.xlu0 %167
    %v169 = vsel %vm162, %v136, 0.0
    %170 = vadd.xlane.f32.xlu0 %v169
    %v171 = vpop.xlane.xlu0 %170
    %v172 = vsel %vm162, %v137, 0.0
    %173 = vadd.xlane.f32.xlu0 %v172
    %v174 = vpop.xlane.xlu0 %173
    %v175 = vrcp.pop 32.0
    %v176 = vmul.f32 %v165, %v175
    %v177 = vmul.f32 %v168, %v175
    %v178 = vmul.f32 %v171, %v175
    %v179 = vmul.f32 %v174, %v175
    %v180 = vsub.f32 %v134, %v176
    %v181 = vsub.f32 %v135, %v177
    %v182 = vsub.f32 %v136, %v178
    %v183 = vsub.f32 %v137, %v179
    %v184 = vmul.f32 %v180, %v180
    %v185 = vmul.f32 %v181, %v181
    %v186 = vmul.f32 %v182, %v182
    %v187 = vmul.f32 %v183, %v183
    %v188 = vsel %vm162, %v184, 0.0
    %189 = vadd.xlane.f32.xlu0 %v188
    %v190 = vpop.xlane.xlu0 %189
    %v191 = vsel %vm162, %v185, 0.0
    %192 = vadd.xlane.f32.xlu0 %v191
    %v193 = vpop.xlane.xlu0 %192
    %v194 = vsel %vm162, %v186, 0.0
    %195 = vadd.xlane.f32.xlu0 %v194
    %v196 = vpop.xlane.xlu0 %195
    %v197 = vsel %vm162, %v187, 0.0
    %198 = vadd.xlane.f32.xlu0 %v197
    %v199 = vpop.xlane.xlu0 %198
    %v200 = vmul.f32 %v190, %v175
    %v201 = vmul.f32 %v193, %v175
    %v202 = vmul.f32 %v196, %v175
    %v203 = vmul.f32 %v199, %v175
    %v204 = vadd.f32 %v200, 1e-05
    %v205 = vadd.f32 %v201, 1e-05
    %v206 = vadd.f32 %v202, 1e-05
    %v207 = vadd.f32 %v203, 1e-05
    %v208 = vrsqrt.pop %v204
    %v209 = vrsqrt.pop %v205
    %v210 = vrsqrt.pop %v206
    %v211 = vrsqrt.pop %v207
    %v212 = vmul.f32 %v180, %v208
    %v213 = vmul.f32 %v181, %v209
    %v214 = vmul.f32 %v182, %v210
    %v215 = vmul.f32 %v183, %v211
    %v216 = vlaneseq
    %v217 = vshrl.u32 %v216, 7
    %v218 = vsub.s32 0, %v217
    %v219 = vrot.slane %v160, %v218
    %v220 = vmul.f32 %v212, %v219
    %v221 = vmul.f32 %v213, %v219
    %v222 = vmul.f32 %v214, %v219
    %v223 = vmul.f32 %v215, %v219
    %v224 = vlaneseq
    %v225 = vshrl.u32 %v224, 7
    %v226 = vsub.s32 1, %v225
    %v227 = vrot.slane %v160, %v226
    %v228 = vadd.f32 %v220, %v227
    %v229 = vadd.f32 %v221, %v227
    %v230 = vadd.f32 %v222, %v227
    %v231 = vadd.f32 %v223, %v227
    %v232 = vlaneseq
    %v233 = vshrl.u32 %v232, 7
    %v234 = vsub.s32 5, %v233
    %v235 = vrot.slane %v160, %v234
    %v237 = vsel %vm162, %v228, 0
    %v240 = vsel %vm162, %v229, 0
    %v243 = vsel %vm162, %v230, 0
    %v246 = vsel %vm162, %v231, 0
    %248 = vmatprep.subr.mxu0 0.0
    %249 = vmatpush1.msra.mxu0 %v138
    %250 = vmatprep.subr.mxu0 0.0
    %251 = vmatpush1.msra.mxu0 %v139
    %252 = vmatprep.subr.mxu0 0.0
    %253 = vmatpush1.msra.mxu0 %v140
    %254 = vmatprep.subr.mxu0 0.0
    %255 = vmatpush1.msra.mxu0 %v141
    %256 = vmatprep.subr.mxu0 0.0
    %257 = vmatpush1.msra.mxu0 0.0
    %258 = vmatprep.subr.mxu0 0.0
    %259 = vmatpush1.msra.mxu0 0.0
    %260 = vmatprep.subr.mxu0 0.0
    %261 = vmatpush1.msra.mxu0 0.0
    %262 = vmatprep.subr.mxu0 0.0
    %263 = vmatpush1.msra.mxu0 0.0
    %264 = vmatprep.subr.mxu0 0.0
    %265 = vmatpush1.msra.mxu0 0.0
    %266 = vmatprep.subr.mxu0 0.0
    %267 = vmatpush1.msra.mxu0 0.0
    %268 = vmatprep.subr.mxu0 0.0
    %269 = vmatpush1.msra.mxu0 0.0
    %270 = vmatprep.subr.mxu0 0.0
    %271 = vmatpush1.msra.mxu0 0.0
    %272 = vmatprep.subr.mxu0 0.0
    %273 = vmatpush1.msra.mxu0 0.0
    %274 = vmatprep.subr.mxu0 0.0
    %275 = vmatpush1.msra.mxu0 0.0
    %276 = vmatprep.subr.mxu0 0.0
    %277 = vmatpush1.msra.mxu0 0.0
    %278 = vmatprep.subr.mxu0 0.0
    %279 = vmatpush1.msra.mxu0 0.0
    %280 = vmatprep.subr.mxu0 0.0
    %281 = vmatpush1.msra.mxu0 0.0
    %282 = vmatprep.subr.mxu0 0.0
    %283 = vmatpush1.msra.mxu0 0.0
    %284 = vmatprep.subr.mxu0 0.0
    %285 = vmatpush1.msra.mxu0 0.0
    %286 = vmatprep.subr.mxu0 0.0
    %287 = vmatpush1.msra.mxu0 0.0
    %288 = vmatprep.subr.mxu0 0.0
    %289 = vmatpush1.msra.mxu0 0.0
    %290 = vmatprep.subr.mxu0 0.0
    %291 = vmatpush1.msra.mxu0 0.0
    %292 = vmatprep.subr.mxu0 0.0
    %293 = vmatpush1.msra.mxu0 0.0
    %294 = vmatprep.subr.mxu0 0.0
    %295 = vmatpush1.msra.mxu0 0.0
    %296 = vmatprep.subr.mxu0 0.0
    %297 = vmatpush1.msra.mxu0 0.0
    %298 = vmatprep.subr.mxu0 0.0
    %299 = vmatpush1.msra.mxu0 0.0
    %300 = vmatprep.subr.mxu0 0.0
    %301 = vmatpush1.msra.mxu0 0.0
    %302 = vmatprep.subr.mxu0 0.0
    %303 = vmatpush1.msra.mxu0 0.0
    %304 = vmatprep.subr.mxu0 0.0
    %305 = vmatpush1.msra.mxu0 0.0
    %306 = vmatprep.subr.mxu0 0.0
    %307 = vmatpush1.msra.mxu0 0.0
    %308 = vmatprep.subr.mxu0 0.0
    %309 = vmatpush1.msra.mxu0 0.0
    %310 = vmatprep.subr.mxu0 0.0
    %311 = vmatpush1.msra.mxu0 0.0
    %312 = vmatprep.mubr.f32.mxu0 0.0
    %313 = vmatmul.mubr.f32.gmra.mrb[0].mxu0 %v237
    %v314 = vpop.f32.mrb[0].mxu0
    %v315 = vadd.f32 %v235, %v314
    %v316 = vpop.f32.mrb[0].mxu0
    %317 = vmatprep.mubr.f32.mxu0 0.0
    %318 = vmatmul.mubr.f32.gmra.mrb[0].mxu0 %v240
    %v319 = vpop.f32.mrb[0].mxu0
    %v320 = vadd.f32 %v235, %v319
    %v321 = vpop.f32.mrb[0].mxu0
    %322 = vmatprep.mubr.f32.mxu0 0.0
    %323 = vmatmul.mubr.f32.gmra.mrb[0].mxu0 %v243
    %v324 = vpop.f32.mrb[0].mxu0
    %v325 = vadd.f32 %v235, %v324
    %v326 = vpop.f32.mrb[0].mxu0
    %327 = vmatprep.mubr.f32.mxu0 0.0
    %328 = vmatmul.mubr.f32.gmra.mrb[0].mxu0 %v246
    %v329 = vpop.f32.mrb[0].mxu0
    %v330 = vadd.f32 %v235, %v329
    %v331 = vpop.f32.mrb[0].mxu0
    %332 = vdwg.mxu0
    %v333 = vxor.u32 %v315, 2147483648
    %v334 = vxor.u32 %v320, 2147483648
    %v335 = vxor.u32 %v325, 2147483648
    %v336 = vxor.u32 %v330, 2147483648
    %v337 = vmul.f32 %v333, 1.442695
    %v338 = vpow.pop %v337
    %v339 = vmul.f32 %v334, 1.442695
    %v340 = vpow.pop %v339
    %v341 = vmul.f32 %v335, 1.442695
    %v342 = vpow.pop %v341
    %v343 = vmul.f32 %v336, 1.442695
    %v344 = vpow.pop %v343
    %v345 = vadd.f32 %v338, 1.0
    %v346 = vadd.f32 %v340, 1.0
    %v347 = vadd.f32 %v342, 1.0
    %v348 = vadd.f32 %v344, 1.0
    %v349 = vrcp.pop %v345
    %v350 = vmul.f32 1.0, %v349
    %v351 = vrcp.pop %v346
    %v352 = vmul.f32 1.0, %v351
    %v353 = vrcp.pop %v347
    %v354 = vmul.f32 1.0, %v353
    %v355 = vrcp.pop %v348
    %v356 = vmul.f32 1.0, %v355
    %v357 = vmul.f32 %v350, 0.99
    %v358 = vmul.f32 %v352, 0.99
    %v359 = vmul.f32 %v354, 0.99
    %v360 = vmul.f32 %v356, 0.99
    %v361 = vadd.f32 %v357, 0.01
    %v362 = vadd.f32 %v358, 0.01
    %v363 = vadd.f32 %v359, 0.01
    %v364 = vadd.f32 %v360, 0.01
    %v365 = vlaneseq
    %v366 = vshrl.u32 %v365, 7
    %v367 = vsub.s32 4, %v366
    %v368 = vrot.slane %v160, %v367
    %370 = vset.pattern.permute.xlu0 16
    %371 = vperm.xlu0 %370, %v361
    %v372 = vpop.permute.xlu0 %371
    %375 = vset.pattern.permute.xlu0 16
    %376 = vperm.xlu0 %375, %v362
    %v377 = vpop.permute.xlu0 %376
    %380 = vset.pattern.permute.xlu0 16
    %381 = vperm.xlu0 %380, %v363
    %v382 = vpop.permute.xlu0 %381
    %385 = vset.pattern.permute.xlu0 16
    %386 = vperm.xlu0 %385, %v364
    %v387 = vpop.permute.xlu0 %386
    %v389 = vmul.f32 %v368, %v372
    %v390 = vmul.f32 %v368, %v377
    %v391 = vmul.f32 %v368, %v382
    %v392 = vmul.f32 %v368, %v387
    %v393 = vmul.f32 %v389, 1.442695
    %v394 = vpow.pop %v393
    %v395 = vmul.f32 %v390, 1.442695
    %v396 = vpow.pop %v395
    %v397 = vmul.f32 %v391, 1.442695
    %v398 = vpow.pop %v397
    %v399 = vmul.f32 %v392, 1.442695
    %v400 = vpow.pop %v399
    %405 = vrot.lane.b32.xlu0 %v315, 16
    %v406 = vpop.permute.xlu0 %405
    %407 = vrot.lane.b32.xlu0 %v320, 16
    %v408 = vpop.permute.xlu0 %407
    %409 = vrot.lane.b32.xlu0 %v325, 16
    %v410 = vpop.permute.xlu0 %409
    %411 = vrot.lane.b32.xlu0 %v330, 16
    %v412 = vpop.permute.xlu0 %411
    %vm417 = vcmask 130048
    %v418 = vsel %vm417, %v394, %v406
    %v419 = vsel %vm417, %v396, %v408
    %v420 = vsel %vm417, %v398, %v410
    %v421 = vsel %vm417, %v400, %v412
    %v423 = vrot.slane %v421, 7
    %vm428 = vcmask 1040384
    %v429 = vrot.slane %v418, 7
    %v430 = vrot.slane %v419, 7
    %v431 = vsel %vm428, %v429, %v430
    %v432 = vrot.slane %v420, 7
    %v433 = vsel %vm428, %v430, %v432
    %v434 = vsel %vm428, %v432, %v423
    %v439 = vsel %vm428, %v423, %v429
    %441 = vset.pattern.permute.xlu0 32
    %442 = vperm.xlu0 %441, %v23
    %v443 = vpop.permute.xlu0 %442
    %446 = vset.pattern.permute.xlu0 32
    %447 = vperm.xlu0 %446, %v24
    %v448 = vpop.permute.xlu0 %447
    %451 = vset.pattern.permute.xlu0 32
    %452 = vperm.xlu0 %451, %v25
    %v453 = vpop.permute.xlu0 %452
    %456 = vset.pattern.permute.xlu0 32
    %457 = vperm.xlu0 %456, %v26
    %v458 = vpop.permute.xlu0 %457
    %v460 = vmul.f32 %v439, %v443
    %v461 = vmul.f32 %v431, %v448
    %v462 = vmul.f32 %v433, %v453
    %v463 = vmul.f32 %v434, %v458
    %v464 = vsub.f32 1.0, %v23
    %v465 = vsub.f32 1.0, %v24
    %v466 = vsub.f32 1.0, %v25
    %v467 = vsub.f32 1.0, %v26
    %469 = vset.pattern.permute.xlu0 32
    %470 = vperm.xlu0 %469, %v464
    %v471 = vpop.permute.xlu0 %470
    %474 = vset.pattern.permute.xlu0 32
    %475 = vperm.xlu0 %474, %v465
    %v476 = vpop.permute.xlu0 %475
    %479 = vset.pattern.permute.xlu0 32
    %480 = vperm.xlu0 %479, %v466
    %v481 = vpop.permute.xlu0 %480
    %484 = vset.pattern.permute.xlu0 32
    %485 = vperm.xlu0 %484, %v467
    %v486 = vpop.permute.xlu0 %485
    %v488 = vadd.f32 %v460, %v471
    %v489 = vadd.f32 %v461, %v476
    %v490 = vadd.f32 %v462, %v481
    %v491 = vadd.f32 %v463, %v486
    %v492 = vmul.f32 %v418, %v488
    %v493 = vmul.f32 %v419, %v489
    %v494 = vmul.f32 %v420, %v490
    %v495 = vmul.f32 %v421, %v491
    %500 = vrot.lane.b32.xlu0 %v460, 112
    %v501 = vpop.permute.xlu0 %500
    %502 = vrot.lane.b32.xlu0 %v461, 112
    %v503 = vpop.permute.xlu0 %502
    %504 = vrot.lane.b32.xlu0 %v462, 112
    %v505 = vpop.permute.xlu0 %504
    %506 = vrot.lane.b32.xlu0 %v463, 112
    %v507 = vpop.permute.xlu0 %506
    %v512 = vmul.f32 %v418, %v501
    %v513 = vmul.f32 %v419, %v503
    %v514 = vmul.f32 %v420, %v505
    %v515 = vmul.f32 %v421, %v507
    %516 = vrot.lane.b32.xlu0 %v418, 112
    %v517 = vpop.permute.xlu0 %516
    %518 = vrot.lane.b32.xlu0 %v419, 112
    %v519 = vpop.permute.xlu0 %518
    %520 = vrot.lane.b32.xlu0 %v420, 112
    %v521 = vpop.permute.xlu0 %520
    %522 = vrot.lane.b32.xlu0 %v421, 112
    %v523 = vpop.permute.xlu0 %522
    %v528 = vadd.f32 %v512, %v517
    %v529 = vadd.f32 %v513, %v519
    %v530 = vadd.f32 %v514, %v521
    %v531 = vadd.f32 %v515, %v523
    %536 = vrot.lane.b32.xlu0 %v528, 16
    %v537 = vpop.permute.xlu0 %536
    %538 = vrot.lane.b32.xlu0 %v529, 16
    %v539 = vpop.permute.xlu0 %538
    %540 = vrot.lane.b32.xlu0 %v530, 16
    %v541 = vpop.permute.xlu0 %540
    %542 = vrot.lane.b32.xlu0 %v531, 16
    %v543 = vpop.permute.xlu0 %542
    %v548 = vsel %vm417, %v492, %v537
    %v549 = vsel %vm417, %v493, %v539
    %v550 = vsel %vm417, %v494, %v541
    %v551 = vsel %vm417, %v495, %v543
    %v553 = vrot.slane %v551, 6
    %vm558 = vcmask 1041408
    %v559 = vrot.slane %v548, 6
    %v560 = vrot.slane %v549, 6
    %v561 = vsel %vm558, %v559, %v560
    %v562 = vrot.slane %v550, 6
    %v563 = vsel %vm558, %v560, %v562
    %v564 = vsel %vm558, %v562, %v553
    %v569 = vsel %vm558, %v553, %v559
    %570 = vset.pattern.permute.xlu0 33
    %571 = vperm.xlu0 %570, %v23
    %v572 = vpop.permute.xlu0 %571
    %574 = vset.pattern.permute.xlu0 33
    %575 = vperm.xlu0 %574, %v24
    %v576 = vpop.permute.xlu0 %575
    %578 = vset.pattern.permute.xlu0 33
    %579 = vperm.xlu0 %578, %v25
    %v580 = vpop.permute.xlu0 %579
    %582 = vset.pattern.permute.xlu0 33
    %583 = vperm.xlu0 %582, %v26
    %v584 = vpop.permute.xlu0 %583
    %v586 = vmul.f32 %v569, %v572
    %v587 = vmul.f32 %v561, %v576
    %v588 = vmul.f32 %v563, %v580
    %v589 = vmul.f32 %v564, %v584
    %590 = vset.pattern.permute.xlu0 33
    %591 = vperm.xlu0 %590, %v464
    %v592 = vpop.permute.xlu0 %591
    %594 = vset.pattern.permute.xlu0 33
    %595 = vperm.xlu0 %594, %v465
    %v596 = vpop.permute.xlu0 %595
    %598 = vset.pattern.permute.xlu0 33
    %599 = vperm.xlu0 %598, %v466
    %v600 = vpop.permute.xlu0 %599
    %602 = vset.pattern.permute.xlu0 33
    %603 = vperm.xlu0 %602, %v467
    %v604 = vpop.permute.xlu0 %603
    %v606 = vadd.f32 %v586, %v592
    %v607 = vadd.f32 %v587, %v596
    %v608 = vadd.f32 %v588, %v600
    %v609 = vadd.f32 %v589, %v604
    %v610 = vmul.f32 %v548, %v606
    %v611 = vmul.f32 %v549, %v607
    %v612 = vmul.f32 %v550, %v608
    %v613 = vmul.f32 %v551, %v609
    %618 = vrot.lane.b32.xlu0 %v586, 112
    %v619 = vpop.permute.xlu0 %618
    %620 = vrot.lane.b32.xlu0 %v587, 112
    %v621 = vpop.permute.xlu0 %620
    %622 = vrot.lane.b32.xlu0 %v588, 112
    %v623 = vpop.permute.xlu0 %622
    %624 = vrot.lane.b32.xlu0 %v589, 112
    %v625 = vpop.permute.xlu0 %624
    %v630 = vmul.f32 %v548, %v619
    %v631 = vmul.f32 %v549, %v621
    %v632 = vmul.f32 %v550, %v623
    %v633 = vmul.f32 %v551, %v625
    %634 = vrot.lane.b32.xlu0 %v548, 112
    %v635 = vpop.permute.xlu0 %634
    %636 = vrot.lane.b32.xlu0 %v549, 112
    %v637 = vpop.permute.xlu0 %636
    %638 = vrot.lane.b32.xlu0 %v550, 112
    %v639 = vpop.permute.xlu0 %638
    %640 = vrot.lane.b32.xlu0 %v551, 112
    %v641 = vpop.permute.xlu0 %640
    %v646 = vadd.f32 %v630, %v635
    %v647 = vadd.f32 %v631, %v637
    %v648 = vadd.f32 %v632, %v639
    %v649 = vadd.f32 %v633, %v641
    %654 = vrot.lane.b32.xlu0 %v646, 16
    %v655 = vpop.permute.xlu0 %654
    %656 = vrot.lane.b32.xlu0 %v647, 16
    %v657 = vpop.permute.xlu0 %656
    %658 = vrot.lane.b32.xlu0 %v648, 16
    %v659 = vpop.permute.xlu0 %658
    %660 = vrot.lane.b32.xlu0 %v649, 16
    %v661 = vpop.permute.xlu0 %660
    %v666 = vsel %vm417, %v610, %v655
    %v667 = vsel %vm417, %v611, %v657
    %v668 = vsel %vm417, %v612, %v659
    %v669 = vsel %vm417, %v613, %v661
    %v671 = vrot.slane %v669, 4
    %vm676 = vcmask 1043456
    %v677 = vrot.slane %v666, 4
    %v678 = vrot.slane %v667, 4
    %v679 = vsel %vm676, %v677, %v678
    %v680 = vrot.slane %v668, 4
    %v681 = vsel %vm676, %v678, %v680
    %v682 = vsel %vm676, %v680, %v671
    %v687 = vsel %vm676, %v671, %v677
    %688 = vset.pattern.permute.xlu0 34
    %689 = vperm.xlu0 %688, %v23
    %v690 = vpop.permute.xlu0 %689
    %692 = vset.pattern.permute.xlu0 34
    %693 = vperm.xlu0 %692, %v24
    %v694 = vpop.permute.xlu0 %693
    %696 = vset.pattern.permute.xlu0 34
    %697 = vperm.xlu0 %696, %v25
    %v698 = vpop.permute.xlu0 %697
    %700 = vset.pattern.permute.xlu0 34
    %701 = vperm.xlu0 %700, %v26
    %v702 = vpop.permute.xlu0 %701
    %v704 = vmul.f32 %v687, %v690
    %v705 = vmul.f32 %v679, %v694
    %v706 = vmul.f32 %v681, %v698
    %v707 = vmul.f32 %v682, %v702
    %708 = vset.pattern.permute.xlu0 34
    %709 = vperm.xlu0 %708, %v464
    %v710 = vpop.permute.xlu0 %709
    %712 = vset.pattern.permute.xlu0 34
    %713 = vperm.xlu0 %712, %v465
    %v714 = vpop.permute.xlu0 %713
    %716 = vset.pattern.permute.xlu0 34
    %717 = vperm.xlu0 %716, %v466
    %v718 = vpop.permute.xlu0 %717
    %720 = vset.pattern.permute.xlu0 34
    %721 = vperm.xlu0 %720, %v467
    %v722 = vpop.permute.xlu0 %721
    %v724 = vadd.f32 %v704, %v710
    %v725 = vadd.f32 %v705, %v714
    %v726 = vadd.f32 %v706, %v718
    %v727 = vadd.f32 %v707, %v722
    %v728 = vmul.f32 %v666, %v724
    %v729 = vmul.f32 %v667, %v725
    %v730 = vmul.f32 %v668, %v726
    %v731 = vmul.f32 %v669, %v727
    %736 = vrot.lane.b32.xlu0 %v704, 112
    %v737 = vpop.permute.xlu0 %736
    %738 = vrot.lane.b32.xlu0 %v705, 112
    %v739 = vpop.permute.xlu0 %738
    %740 = vrot.lane.b32.xlu0 %v706, 112
    %v741 = vpop.permute.xlu0 %740
    %742 = vrot.lane.b32.xlu0 %v707, 112
    %v743 = vpop.permute.xlu0 %742
    %v748 = vmul.f32 %v666, %v737
    %v749 = vmul.f32 %v667, %v739
    %v750 = vmul.f32 %v668, %v741
    %v751 = vmul.f32 %v669, %v743
    %752 = vrot.lane.b32.xlu0 %v666, 112
    %v753 = vpop.permute.xlu0 %752
    %754 = vrot.lane.b32.xlu0 %v667, 112
    %v755 = vpop.permute.xlu0 %754
    %756 = vrot.lane.b32.xlu0 %v668, 112
    %v757 = vpop.permute.xlu0 %756
    %758 = vrot.lane.b32.xlu0 %v669, 112
    %v759 = vpop.permute.xlu0 %758
    %v764 = vadd.f32 %v748, %v753
    %v765 = vadd.f32 %v749, %v755
    %v766 = vadd.f32 %v750, %v757
    %v767 = vadd.f32 %v751, %v759
    %772 = vrot.lane.b32.xlu0 %v764, 16
    %v773 = vpop.permute.xlu0 %772
    %774 = vrot.lane.b32.xlu0 %v765, 16
    %v775 = vpop.permute.xlu0 %774
    %776 = vrot.lane.b32.xlu0 %v766, 16
    %v777 = vpop.permute.xlu0 %776
    %778 = vrot.lane.b32.xlu0 %v767, 16
    %v779 = vpop.permute.xlu0 %778
    %v784 = vsel %vm417, %v728, %v773
    %v785 = vsel %vm417, %v729, %v775
    %v786 = vsel %vm417, %v730, %v777
    %v787 = vsel %vm417, %v731, %v779
    %788 = vset.pattern.permute.xlu0 35
    %789 = vperm.xlu0 %788, %v23
    %v790 = vpop.permute.xlu0 %789
    %792 = vset.pattern.permute.xlu0 35
    %793 = vperm.xlu0 %792, %v24
    %v794 = vpop.permute.xlu0 %793
    %796 = vset.pattern.permute.xlu0 35
    %797 = vperm.xlu0 %796, %v25
    %v798 = vpop.permute.xlu0 %797
    %800 = vset.pattern.permute.xlu0 35
    %801 = vperm.xlu0 %800, %v26
    %v802 = vpop.permute.xlu0 %801
    %v804 = vmul.f32 %v787, %v790
    %v805 = vmul.f32 %v784, %v794
    %v806 = vmul.f32 %v785, %v798
    %v807 = vmul.f32 %v786, %v802
    %808 = vset.pattern.permute.xlu0 35
    %809 = vperm.xlu0 %808, %v464
    %v810 = vpop.permute.xlu0 %809
    %812 = vset.pattern.permute.xlu0 35
    %813 = vperm.xlu0 %812, %v465
    %v814 = vpop.permute.xlu0 %813
    %816 = vset.pattern.permute.xlu0 35
    %817 = vperm.xlu0 %816, %v466
    %v818 = vpop.permute.xlu0 %817
    %820 = vset.pattern.permute.xlu0 35
    %821 = vperm.xlu0 %820, %v467
    %v822 = vpop.permute.xlu0 %821
    %v824 = vadd.f32 %v804, %v810
    %v825 = vadd.f32 %v805, %v814
    %v826 = vadd.f32 %v806, %v818
    %v827 = vadd.f32 %v807, %v822
    %v828 = vmul.f32 %v784, %v824
    %v829 = vmul.f32 %v785, %v825
    %v830 = vmul.f32 %v786, %v826
    %v831 = vmul.f32 %v787, %v827
    %836 = vrot.lane.b32.xlu0 %v804, 112
    %v837 = vpop.permute.xlu0 %836
    %838 = vrot.lane.b32.xlu0 %v805, 112
    %v839 = vpop.permute.xlu0 %838
    %840 = vrot.lane.b32.xlu0 %v806, 112
    %v841 = vpop.permute.xlu0 %840
    %842 = vrot.lane.b32.xlu0 %v807, 112
    %v843 = vpop.permute.xlu0 %842
    %v848 = vmul.f32 %v784, %v837
    %v849 = vmul.f32 %v785, %v839
    %v850 = vmul.f32 %v786, %v841
    %v851 = vmul.f32 %v787, %v843
    %856 = vrot.lane.b32.xlu0 %v784, 112
    %v857 = vpop.permute.xlu0 %856
    %858 = vrot.lane.b32.xlu0 %v785, 112
    %v859 = vpop.permute.xlu0 %858
    %860 = vrot.lane.b32.xlu0 %v786, 112
    %v861 = vpop.permute.xlu0 %860
    %862 = vrot.lane.b32.xlu0 %v787, 112
    %v863 = vpop.permute.xlu0 %862
    %v868 = vadd.f32 %v848, %v857
    %v869 = vadd.f32 %v849, %v859
    %v870 = vadd.f32 %v850, %v861
    %v871 = vadd.f32 %v851, %v863
    %876 = vrot.lane.b32.xlu0 %v868, 16
    %v877 = vpop.permute.xlu0 %876
    %878 = vrot.lane.b32.xlu0 %v869, 16
    %v879 = vpop.permute.xlu0 %878
    %880 = vrot.lane.b32.xlu0 %v870, 16
    %v881 = vpop.permute.xlu0 %880
    %882 = vrot.lane.b32.xlu0 %v871, 16
    %v883 = vpop.permute.xlu0 %882
    %v888 = vsel %vm417, %v828, %v877
    %v889 = vsel %vm417, %v829, %v879
    %v890 = vsel %vm417, %v830, %v881
    %v891 = vsel %vm417, %v831, %v883
    %896 = vrot.lane.b32.xlu0 %v888, 112
    %v897 = vpop.permute.xlu0 %896
    %898 = vrot.lane.b32.xlu0 %v889, 112
    %v899 = vpop.permute.xlu0 %898
    %900 = vrot.lane.b32.xlu0 %v890, 112
    %v901 = vpop.permute.xlu0 %900
    %902 = vrot.lane.b32.xlu0 %v891, 112
    %v903 = vpop.permute.xlu0 %902
    %908 = vrot.lane.b32.xlu0 %v228, 16
    %v909 = vpop.permute.xlu0 %908
    %910 = vrot.lane.b32.xlu0 %v229, 16
    %v911 = vpop.permute.xlu0 %910
    %912 = vrot.lane.b32.xlu0 %v230, 16
    %v913 = vpop.permute.xlu0 %912
    %914 = vrot.lane.b32.xlu0 %v231, 16
    %v915 = vpop.permute.xlu0 %914
    %v920 = vsel %vm417, %v897, %v909
    %v921 = vsel %vm417, %v899, %v911
    %v922 = vsel %vm417, %v901, %v913
    %v923 = vsel %vm417, %v903, %v915
    %vm924 = vcmask 392192
    %v926 = vsel %vm924, %v920, 0
    %v929 = vsel %vm924, %v921, 0
    %v932 = vsel %vm924, %v922, 0
    %v935 = vsel %vm924, %v923, 0
    %937 = vmatprep.subr.mxu0 0.0
    %938 = vmatpush1.msra.mxu0 %v142
    %939 = vmatprep.subr.mxu0 0.0
    %940 = vmatpush1.msra.mxu0 %v143
    %941 = vmatprep.subr.mxu0 0.0
    %942 = vmatpush1.msra.mxu0 %v144
    %943 = vmatprep.subr.mxu0 0.0
    %944 = vmatpush1.msra.mxu0 %v145
    %945 = vmatprep.subr.mxu0 0.0
    %946 = vmatpush1.msra.mxu0 %v146
    %947 = vmatprep.subr.mxu0 0.0
    %948 = vmatpush1.msra.mxu0 %v147
    %949 = vmatprep.subr.mxu0 0.0
    %950 = vmatpush1.msra.mxu0 0.0
    %951 = vmatprep.subr.mxu0 0.0
    %952 = vmatpush1.msra.mxu0 0.0
    %953 = vmatprep.subr.mxu0 0.0
    %954 = vmatpush1.msra.mxu0 0.0
    %955 = vmatprep.subr.mxu0 0.0
    %956 = vmatpush1.msra.mxu0 0.0
    %957 = vmatprep.subr.mxu0 0.0
    %958 = vmatpush1.msra.mxu0 0.0
    %959 = vmatprep.subr.mxu0 0.0
    %960 = vmatpush1.msra.mxu0 0.0
    %961 = vmatprep.subr.mxu0 0.0
    %962 = vmatpush1.msra.mxu0 0.0
    %963 = vmatprep.subr.mxu0 0.0
    %964 = vmatpush1.msra.mxu0 0.0
    %965 = vmatprep.subr.mxu0 0.0
    %966 = vmatpush1.msra.mxu0 0.0
    %967 = vmatprep.subr.mxu0 0.0
    %968 = vmatpush1.msra.mxu0 0.0
    %969 = vmatprep.subr.mxu0 0.0
    %970 = vmatpush1.msra.mxu0 0.0
    %971 = vmatprep.subr.mxu0 0.0
    %972 = vmatpush1.msra.mxu0 0.0
    %973 = vmatprep.subr.mxu0 0.0
    %974 = vmatpush1.msra.mxu0 0.0
    %975 = vmatprep.subr.mxu0 0.0
    %976 = vmatpush1.msra.mxu0 0.0
    %977 = vmatprep.subr.mxu0 0.0
    %978 = vmatpush1.msra.mxu0 0.0
    %979 = vmatprep.subr.mxu0 0.0
    %980 = vmatpush1.msra.mxu0 0.0
    %981 = vmatprep.subr.mxu0 0.0
    %982 = vmatpush1.msra.mxu0 0.0
    %983 = vmatprep.subr.mxu0 0.0
    %984 = vmatpush1.msra.mxu0 0.0
    %985 = vmatprep.subr.mxu0 0.0
    %986 = vmatpush1.msra.mxu0 0.0
    %987 = vmatprep.subr.mxu0 0.0
    %988 = vmatpush1.msra.mxu0 0.0
    %989 = vmatprep.subr.mxu0 0.0
    %990 = vmatpush1.msra.mxu0 0.0
    %991 = vmatprep.subr.mxu0 0.0
    %992 = vmatpush1.msra.mxu0 0.0
    %993 = vmatprep.subr.mxu0 0.0
    %994 = vmatpush1.msra.mxu0 0.0
    %995 = vmatprep.subr.mxu0 0.0
    %996 = vmatpush1.msra.mxu0 0.0
    %997 = vmatprep.subr.mxu0 0.0
    %998 = vmatpush1.msra.mxu0 0.0
    %999 = vmatprep.subr.mxu0 0.0
    %1000 = vmatpush1.msra.mxu0 0.0
    %1001 = vmatprep.mubr.f32.mxu0 0.0
    %1002 = vmatmul.mubr.f32.gmra.mrb[0].mxu0 %v926
    %v1003 = vpop.f32.mrb[0].mxu0
    %v1004 = vadd.f32 0.0, %v1003
    %v1005 = vpop.f32.mrb[0].mxu0
    %1006 = vmatprep.mubr.f32.mxu0 0.0
    %1007 = vmatmul.mubr.f32.gmra.mrb[0].mxu0 %v929
    %v1008 = vpop.f32.mrb[0].mxu0
    %v1009 = vadd.f32 0.0, %v1008
    %v1010 = vpop.f32.mrb[0].mxu0
    %1011 = vmatprep.mubr.f32.mxu0 0.0
    %1012 = vmatmul.mubr.f32.gmra.mrb[0].mxu0 %v932
    %v1013 = vpop.f32.mrb[0].mxu0
    %v1014 = vadd.f32 0.0, %v1013
    %v1015 = vpop.f32.mrb[0].mxu0
    %1016 = vmatprep.mubr.f32.mxu0 0.0
    %1017 = vmatmul.mubr.f32.gmra.mrb[0].mxu0 %v935
    %v1018 = vpop.f32.mrb[0].mxu0
    %v1019 = vadd.f32 0.0, %v1018
    %v1020 = vpop.f32.mrb[0].mxu0
    %1021 = vdwg.mxu0
    %v1022 = vlaneseq
    %v1023 = vshrl.u32 %v1022, 7
    %v1024 = vsub.s32 6, %v1023
    %v1025 = vrot.slane %v160, %v1024
    %v1026 = vadd.f32 %v1004, %v1025
    %v1027 = vadd.f32 %v1009, %v1025
    %v1028 = vadd.f32 %v1014, %v1025
    %v1029 = vadd.f32 %v1019, %v1025
    %v1030 = vadd.f32 %v134, %v1026
    %v1031 = vadd.f32 %v135, %v1027
    %v1032 = vadd.f32 %v136, %v1028
    %v1033 = vadd.f32 %v137, %v1029
    %v1034 = vsel %vm162, %v1030, 0.0
    %1035 = vadd.xlane.f32.xlu0 %v1034
    %v1036 = vpop.xlane.xlu0 %1035
    %v1037 = vsel %vm162, %v1031, 0.0
    %1038 = vadd.xlane.f32.xlu0 %v1037
    %v1039 = vpop.xlane.xlu0 %1038
    %v1040 = vsel %vm162, %v1032, 0.0
    %1041 = vadd.xlane.f32.xlu0 %v1040
    %v1042 = vpop.xlane.xlu0 %1041
    %v1043 = vsel %vm162, %v1033, 0.0
    %1044 = vadd.xlane.f32.xlu0 %v1043
    %v1045 = vpop.xlane.xlu0 %1044
    %v1046 = vmul.f32 %v1036, %v175
    %v1047 = vmul.f32 %v1039, %v175
    %v1048 = vmul.f32 %v1042, %v175
    %v1049 = vmul.f32 %v1045, %v175
    %v1050 = vsub.f32 %v1030, %v1046
    %v1051 = vsub.f32 %v1031, %v1047
    %v1052 = vsub.f32 %v1032, %v1048
    %v1053 = vsub.f32 %v1033, %v1049
    %v1054 = vmul.f32 %v1050, %v1050
    %v1055 = vmul.f32 %v1051, %v1051
    %v1056 = vmul.f32 %v1052, %v1052
    %v1057 = vmul.f32 %v1053, %v1053
    %v1058 = vsel %vm162, %v1054, 0.0
    %1059 = vadd.xlane.f32.xlu0 %v1058
    %v1060 = vpop.xlane.xlu0 %1059
    %v1061 = vsel %vm162, %v1055, 0.0
    %1062 = vadd.xlane.f32.xlu0 %v1061
    %v1063 = vpop.xlane.xlu0 %1062
    %v1064 = vsel %vm162, %v1056, 0.0
    %1065 = vadd.xlane.f32.xlu0 %v1064
    %v1066 = vpop.xlane.xlu0 %1065
    %v1067 = vsel %vm162, %v1057, 0.0
    %1068 = vadd.xlane.f32.xlu0 %v1067
    %v1069 = vpop.xlane.xlu0 %1068
    %v1070 = vmul.f32 %v1060, %v175
    %v1071 = vmul.f32 %v1063, %v175
    %v1072 = vmul.f32 %v1066, %v175
    %v1073 = vmul.f32 %v1069, %v175
    %v1074 = vadd.f32 %v1070, 1e-05
    %v1075 = vadd.f32 %v1071, 1e-05
    %v1076 = vadd.f32 %v1072, 1e-05
    %v1077 = vadd.f32 %v1073, 1e-05
    %v1078 = vrsqrt.pop %v1074
    %v1079 = vrsqrt.pop %v1075
    %v1080 = vrsqrt.pop %v1076
    %v1081 = vrsqrt.pop %v1077
    %v1082 = vmul.f32 %v1050, %v1078
    %v1083 = vmul.f32 %v1051, %v1079
    %v1084 = vmul.f32 %v1052, %v1080
    %v1085 = vmul.f32 %v1053, %v1081
    %v1086 = vlaneseq
    %v1087 = vshrl.u32 %v1086, 7
    %v1088 = vsub.s32 2, %v1087
    %v1089 = vrot.slane %v160, %v1088
    %v1090 = vmul.f32 %v1082, %v1089
    %v1091 = vmul.f32 %v1083, %v1089
    %v1092 = vmul.f32 %v1084, %v1089
    %v1093 = vmul.f32 %v1085, %v1089
    %v1094 = vlaneseq
    %v1095 = vshrl.u32 %v1094, 7
    %v1096 = vsub.s32 3, %v1095
    %v1097 = vrot.slane %v160, %v1096
    %v1098 = vadd.f32 %v1090, %v1097
    %v1099 = vadd.f32 %v1091, %v1097
    %v1100 = vadd.f32 %v1092, %v1097
    %v1101 = vadd.f32 %v1093, %v1097
    %v1102 = vlaneseq
    %v1103 = vshrl.u32 %v1102, 7
    %v1104 = vsub.s32 7, %v1103
    %v1105 = vrot.slane %v160, %v1104
    %v1107 = vsel %vm162, %v1098, 0
    %v1110 = vsel %vm162, %v1099, 0
    %v1113 = vsel %vm162, %v1100, 0
    %v1116 = vsel %vm162, %v1101, 0
    %1118 = vmatprep.subr.mxu0 0.0
    %1119 = vmatpush1.msra.mxu0 %v148
    %1120 = vmatprep.subr.mxu0 0.0
    %1121 = vmatpush1.msra.mxu0 %v149
    %1122 = vmatprep.subr.mxu0 0.0
    %1123 = vmatpush1.msra.mxu0 %v150
    %1124 = vmatprep.subr.mxu0 0.0
    %1125 = vmatpush1.msra.mxu0 %v151
    %1126 = vmatprep.subr.mxu0 0.0
    %1127 = vmatpush1.msra.mxu0 0.0
    %1128 = vmatprep.subr.mxu0 0.0
    %1129 = vmatpush1.msra.mxu0 0.0
    %1130 = vmatprep.subr.mxu0 0.0
    %1131 = vmatpush1.msra.mxu0 0.0
    %1132 = vmatprep.subr.mxu0 0.0
    %1133 = vmatpush1.msra.mxu0 0.0
    %1134 = vmatprep.subr.mxu0 0.0
    %1135 = vmatpush1.msra.mxu0 0.0
    %1136 = vmatprep.subr.mxu0 0.0
    %1137 = vmatpush1.msra.mxu0 0.0
    %1138 = vmatprep.subr.mxu0 0.0
    %1139 = vmatpush1.msra.mxu0 0.0
    %1140 = vmatprep.subr.mxu0 0.0
    %1141 = vmatpush1.msra.mxu0 0.0
    %1142 = vmatprep.subr.mxu0 0.0
    %1143 = vmatpush1.msra.mxu0 0.0
    %1144 = vmatprep.subr.mxu0 0.0
    %1145 = vmatpush1.msra.mxu0 0.0
    %1146 = vmatprep.subr.mxu0 0.0
    %1147 = vmatpush1.msra.mxu0 0.0
    %1148 = vmatprep.subr.mxu0 0.0
    %1149 = vmatpush1.msra.mxu0 0.0
    %1150 = vmatprep.subr.mxu0 0.0
    %1151 = vmatpush1.msra.mxu0 0.0
    %1152 = vmatprep.subr.mxu0 0.0
    %1153 = vmatpush1.msra.mxu0 0.0
    %1154 = vmatprep.subr.mxu0 0.0
    %1155 = vmatpush1.msra.mxu0 0.0
    %1156 = vmatprep.subr.mxu0 0.0
    %1157 = vmatpush1.msra.mxu0 0.0
    %1158 = vmatprep.subr.mxu0 0.0
    %1159 = vmatpush1.msra.mxu0 0.0
    %1160 = vmatprep.subr.mxu0 0.0
    %1161 = vmatpush1.msra.mxu0 0.0
    %1162 = vmatprep.subr.mxu0 0.0
    %1163 = vmatpush1.msra.mxu0 0.0
    %1164 = vmatprep.subr.mxu0 0.0
    %1165 = vmatpush1.msra.mxu0 0.0
    %1166 = vmatprep.subr.mxu0 0.0
    %1167 = vmatpush1.msra.mxu0 0.0
    %1168 = vmatprep.subr.mxu0 0.0
    %1169 = vmatpush1.msra.mxu0 0.0
    %1170 = vmatprep.subr.mxu0 0.0
    %1171 = vmatpush1.msra.mxu0 0.0
    %1172 = vmatprep.subr.mxu0 0.0
    %1173 = vmatpush1.msra.mxu0 0.0
    %1174 = vmatprep.subr.mxu0 0.0
    %1175 = vmatpush1.msra.mxu0 0.0
    %1176 = vmatprep.subr.mxu0 0.0
    %1177 = vmatpush1.msra.mxu0 0.0
    %1178 = vmatprep.subr.mxu0 0.0
    %1179 = vmatpush1.msra.mxu0 0.0
    %1180 = vmatprep.subr.mxu0 0.0
    %1181 = vmatpush1.msra.mxu0 0.0
    %1182 = vmatprep.mubr.f32.mxu0 0.0
    %1183 = vmatmul.mubr.f32.gmra.mrb[0].mxu0 %v1107
    %v1184 = vpop.f32.mrb[0].mxu0
    %v1185 = vadd.f32 %v1105, %v1184
    %v1186 = vpop.f32.mrb[0].mxu0
    %1187 = vmatprep.mubr.f32.mxu0 0.0
    %1188 = vmatmul.mubr.f32.gmra.mrb[0].mxu0 %v1110
    %v1189 = vpop.f32.mrb[0].mxu0
    %v1190 = vadd.f32 %v1105, %v1189
    %v1191 = vpop.f32.mrb[0].mxu0
    %1192 = vmatprep.mubr.f32.mxu0 0.0
    %1193 = vmatmul.mubr.f32.gmra.mrb[0].mxu0 %v1113
    %v1194 = vpop.f32.mrb[0].mxu0
    %v1195 = vadd.f32 %v1105, %v1194
    %v1196 = vpop.f32.mrb[0].mxu0
    %1197 = vmatprep.mubr.f32.mxu0 0.0
    %1198 = vmatmul.mubr.f32.gmra.mrb[0].mxu0 %v1116
    %v1199 = vpop.f32.mrb[0].mxu0
    %v1200 = vadd.f32 %v1105, %v1199
    %v1201 = vpop.f32.mrb[0].mxu0
    %1202 = vdwg.mxu0
    %v1203 = vxor.u32 %v1185, 2147483648
    %v1204 = vxor.u32 %v1190, 2147483648
    %v1205 = vxor.u32 %v1195, 2147483648
    %v1206 = vxor.u32 %v1200, 2147483648
    %v1207 = vmul.f32 %v1203, 1.442695
    %v1208 = vpow.pop %v1207
    %v1209 = vmul.f32 %v1204, 1.442695
    %v1210 = vpow.pop %v1209
    %v1211 = vmul.f32 %v1205, 1.442695
    %v1212 = vpow.pop %v1211
    %v1213 = vmul.f32 %v1206, 1.442695
    %v1214 = vpow.pop %v1213
    %v1215 = vadd.f32 %v1208, 1.0
    %v1216 = vadd.f32 %v1210, 1.0
    %v1217 = vadd.f32 %v1212, 1.0
    %v1218 = vadd.f32 %v1214, 1.0
    %v1219 = vrcp.pop %v1215
    %v1220 = vmul.f32 1.0, %v1219
    %v1221 = vrcp.pop %v1216
    %v1222 = vmul.f32 1.0, %v1221
    %v1223 = vrcp.pop %v1217
    %v1224 = vmul.f32 1.0, %v1223
    %v1225 = vrcp.pop %v1218
    %v1226 = vmul.f32 1.0, %v1225
    %v1227 = vmul.f32 %v1185, %v1220
    %v1228 = vmul.f32 %v1190, %v1222
    %v1229 = vmul.f32 %v1195, %v1224
    %v1230 = vmul.f32 %v1200, %v1226
    %1235 = vrot.lane.b32.xlu0 %v1227, 64
    %v1236 = vpop.permute.xlu0 %1235
    %1237 = vrot.lane.b32.xlu0 %v1228, 64
    %v1238 = vpop.permute.xlu0 %1237
    %1239 = vrot.lane.b32.xlu0 %v1229, 64
    %v1240 = vpop.permute.xlu0 %1239
    %1241 = vrot.lane.b32.xlu0 %v1230, 64
    %v1242 = vpop.permute.xlu0 %1241
    %v1247 = vmul.f32 %v1185, %v1236
    %v1248 = vmul.f32 %v1190, %v1238
    %v1249 = vmul.f32 %v1195, %v1240
    %v1250 = vmul.f32 %v1200, %v1242
    %v1252 = vsel %vm36, %v1247, 0
    %v1255 = vsel %vm36, %v1248, 0
    %v1258 = vsel %vm36, %v1249, 0
    %v1261 = vsel %vm36, %v1250, 0
    %1263 = vmatprep.subr.mxu0 0.0
    %1264 = vmatpush1.msra.mxu0 %v152
    %1265 = vmatprep.subr.mxu0 0.0
    %1266 = vmatpush1.msra.mxu0 %v153
    %1267 = vmatprep.subr.mxu0 0.0
    %1268 = vmatpush1.msra.mxu0 %v154
    %1269 = vmatprep.subr.mxu0 0.0
    %1270 = vmatpush1.msra.mxu0 %v155
    %1271 = vmatprep.subr.mxu0 0.0
    %1272 = vmatpush1.msra.mxu0 %v156
    %1273 = vmatprep.subr.mxu0 0.0
    %1274 = vmatpush1.msra.mxu0 %v157
    %1275 = vmatprep.subr.mxu0 0.0
    %1276 = vmatpush1.msra.mxu0 %v158
    %1277 = vmatprep.subr.mxu0 0.0
    %1278 = vmatpush1.msra.mxu0 %v159
    %1279 = vmatprep.subr.mxu0 0.0
    %1280 = vmatpush1.msra.mxu0 0.0
    %1281 = vmatprep.subr.mxu0 0.0
    %1282 = vmatpush1.msra.mxu0 0.0
    %1283 = vmatprep.subr.mxu0 0.0
    %1284 = vmatpush1.msra.mxu0 0.0
    %1285 = vmatprep.subr.mxu0 0.0
    %1286 = vmatpush1.msra.mxu0 0.0
    %1287 = vmatprep.subr.mxu0 0.0
    %1288 = vmatpush1.msra.mxu0 0.0
    %1289 = vmatprep.subr.mxu0 0.0
    %1290 = vmatpush1.msra.mxu0 0.0
    %1291 = vmatprep.subr.mxu0 0.0
    %1292 = vmatpush1.msra.mxu0 0.0
    %1293 = vmatprep.subr.mxu0 0.0
    %1294 = vmatpush1.msra.mxu0 0.0
    %1295 = vmatprep.subr.mxu0 0.0
    %1296 = vmatpush1.msra.mxu0 0.0
    %1297 = vmatprep.subr.mxu0 0.0
    %1298 = vmatpush1.msra.mxu0 0.0
    %1299 = vmatprep.subr.mxu0 0.0
    %1300 = vmatpush1.msra.mxu0 0.0
    %1301 = vmatprep.subr.mxu0 0.0
    %1302 = vmatpush1.msra.mxu0 0.0
    %1303 = vmatprep.subr.mxu0 0.0
    %1304 = vmatpush1.msra.mxu0 0.0
    %1305 = vmatprep.subr.mxu0 0.0
    %1306 = vmatpush1.msra.mxu0 0.0
    %1307 = vmatprep.subr.mxu0 0.0
    %1308 = vmatpush1.msra.mxu0 0.0
    %1309 = vmatprep.subr.mxu0 0.0
    %1310 = vmatpush1.msra.mxu0 0.0
    %1311 = vmatprep.subr.mxu0 0.0
    %1312 = vmatpush1.msra.mxu0 0.0
    %1313 = vmatprep.subr.mxu0 0.0
    %1314 = vmatpush1.msra.mxu0 0.0
    %1315 = vmatprep.subr.mxu0 0.0
    %1316 = vmatpush1.msra.mxu0 0.0
    %1317 = vmatprep.subr.mxu0 0.0
    %1318 = vmatpush1.msra.mxu0 0.0
    %1319 = vmatprep.subr.mxu0 0.0
    %1320 = vmatpush1.msra.mxu0 0.0
    %1321 = vmatprep.subr.mxu0 0.0
    %1322 = vmatpush1.msra.mxu0 0.0
    %1323 = vmatprep.subr.mxu0 0.0
    %1324 = vmatpush1.msra.mxu0 0.0
    %1325 = vmatprep.subr.mxu0 0.0
    %1326 = vmatpush1.msra.mxu0 0.0
    %1327 = vmatprep.mubr.f32.mxu0 0.0
    %1328 = vmatmul.mubr.f32.gmra.mrb[0].mxu0 %v1252
    %v1329 = vpop.f32.mrb[0].mxu0
    %v1330 = vadd.f32 0.0, %v1329
    %v1331 = vpop.f32.mrb[0].mxu0
    %1332 = vmatprep.mubr.f32.mxu0 0.0
    %1333 = vmatmul.mubr.f32.gmra.mrb[0].mxu0 %v1255
    %v1334 = vpop.f32.mrb[0].mxu0
    %v1335 = vadd.f32 0.0, %v1334
    %v1336 = vpop.f32.mrb[0].mxu0
    %1337 = vmatprep.mubr.f32.mxu0 0.0
    %1338 = vmatmul.mubr.f32.gmra.mrb[0].mxu0 %v1258
    %v1339 = vpop.f32.mrb[0].mxu0
    %v1340 = vadd.f32 0.0, %v1339
    %v1341 = vpop.f32.mrb[0].mxu0
    %1342 = vmatprep.mubr.f32.mxu0 0.0
    %1343 = vmatmul.mubr.f32.gmra.mrb[0].mxu0 %v1261
    %v1344 = vpop.f32.mrb[0].mxu0
    %v1345 = vadd.f32 0.0, %v1344
    %v1346 = vpop.f32.mrb[0].mxu0
    %1347 = vdwg.mxu0
    %v1348 = vadd.f32 %v1030, %v1330
    %v1349 = vadd.f32 %v1031, %v1335
    %v1350 = vadd.f32 %v1032, %v1340
    %v1351 = vadd.f32 %v1033, %v1345
    %v1352 = vlaneseq
    %v1353 = vshrl.u32 %v1352, 7
    %v1354 = vsub.s32 0, %v1353
    %v1355 = vrot.slane %v161, %v1354
    %v1356 = vadd.f32 %v1348, %v1355
    %v1357 = vadd.f32 %v1349, %v1355
    %v1358 = vadd.f32 %v1350, %v1355
    %v1359 = vadd.f32 %v1351, %v1355
    %s1360 = scalar_lea.vmem %s2, 192
    %v1361 = vld [vmem:[%s1360] sm:$0xff]
    %v1362 = vld [vmem:[%s1360 + $0x8] sm:$0xff]
    %v1363 = vld [vmem:[%s1360 + $0x10] sm:$0xff]
    %v1364 = vld [vmem:[%s1360 + $0x18] sm:$0xff]
    %v1365 = vld [vmem:[%s1360 + $0x20] sm:$0xff]
    %v1366 = vld [vmem:[%s1360 + $0x28] sm:$0xff]
    %v1367 = vld [vmem:[%s1360 + $0x30] sm:$0xff]
    %v1368 = vld [vmem:[%s1360 + $0x38] sm:$0xff]
    %v1369 = vld [vmem:[%s1360 + $0x40] sm:$0xff]
    %v1370 = vld [vmem:[%s1360 + $0x48] sm:$0xff]
    %v1371 = vld [vmem:[%s1360 + $0x50] sm:$0xff]
    %v1372 = vld [vmem:[%s1360 + $0x58] sm:$0xff]
    %v1373 = vld [vmem:[%s1360 + $0x60] sm:$0xff]
    %v1374 = vld [vmem:[%s1360 + $0x68] sm:$0xff]
    %v1375 = vld [vmem:[%s1360 + $0x70] sm:$0xff]
    %v1376 = vld [vmem:[%s1360 + $0x78] sm:$0xff]
    %v1377 = vld [vmem:[%s1360 + $0x80] sm:$0xff]
    %v1378 = vld [vmem:[%s1360 + $0x88] sm:$0xff]
    %v1379 = vld [vmem:[%s1360 + $0x90] sm:$0xff]
    %v1380 = vld [vmem:[%s1360 + $0x98] sm:$0xff]
    %v1381 = vld [vmem:[%s1360 + $0xa0] sm:$0xff]
    %v1382 = vld [vmem:[%s1360 + $0xa8] sm:$0xff]
    %v1383 = vld [vmem:[%s1360 + $0xb0] sm:$0xff]
    %v1384 = vld [vmem:[%s1360 + $0xb8] sm:$0xff]
    %v1385 = vsel %vm162, %v1356, 0.0
    %1386 = vadd.xlane.f32.xlu0 %v1385
    %v1387 = vpop.xlane.xlu0 %1386
    %v1388 = vsel %vm162, %v1357, 0.0
    %1389 = vadd.xlane.f32.xlu0 %v1388
    %v1390 = vpop.xlane.xlu0 %1389
    %v1391 = vsel %vm162, %v1358, 0.0
    %1392 = vadd.xlane.f32.xlu0 %v1391
    %v1393 = vpop.xlane.xlu0 %1392
    %v1394 = vsel %vm162, %v1359, 0.0
    %1395 = vadd.xlane.f32.xlu0 %v1394
    %v1396 = vpop.xlane.xlu0 %1395
    %v1397 = vmul.f32 %v1387, %v175
    %v1398 = vmul.f32 %v1390, %v175
    %v1399 = vmul.f32 %v1393, %v175
    %v1400 = vmul.f32 %v1396, %v175
    %v1401 = vsub.f32 %v1356, %v1397
    %v1402 = vsub.f32 %v1357, %v1398
    %v1403 = vsub.f32 %v1358, %v1399
    %v1404 = vsub.f32 %v1359, %v1400
    %v1405 = vmul.f32 %v1401, %v1401
    %v1406 = vmul.f32 %v1402, %v1402
    %v1407 = vmul.f32 %v1403, %v1403
    %v1408 = vmul.f32 %v1404, %v1404
    %v1409 = vsel %vm162, %v1405, 0.0
    %1410 = vadd.xlane.f32.xlu0 %v1409
    %v1411 = vpop.xlane.xlu0 %1410
    %v1412 = vsel %vm162, %v1406, 0.0
    %1413 = vadd.xlane.f32.xlu0 %v1412
    %v1414 = vpop.xlane.xlu0 %1413
    %v1415 = vsel %vm162, %v1407, 0.0
    %1416 = vadd.xlane.f32.xlu0 %v1415
    %v1417 = vpop.xlane.xlu0 %1416
    %v1418 = vsel %vm162, %v1408, 0.0
    %1419 = vadd.xlane.f32.xlu0 %v1418
    %v1420 = vpop.xlane.xlu0 %1419
    %v1421 = vmul.f32 %v1411, %v175
    %v1422 = vmul.f32 %v1414, %v175
    %v1423 = vmul.f32 %v1417, %v175
    %v1424 = vmul.f32 %v1420, %v175
    %v1425 = vadd.f32 %v1421, 1e-05
    %v1426 = vadd.f32 %v1422, 1e-05
    %v1427 = vadd.f32 %v1423, 1e-05
    %v1428 = vadd.f32 %v1424, 1e-05
    %v1429 = vrsqrt.pop %v1425
    %v1430 = vrsqrt.pop %v1426
    %v1431 = vrsqrt.pop %v1427
    %v1432 = vrsqrt.pop %v1428
    %v1433 = vmul.f32 %v1401, %v1429
    %v1434 = vmul.f32 %v1402, %v1430
    %v1435 = vmul.f32 %v1403, %v1431
    %v1436 = vmul.f32 %v1404, %v1432
    %v1437 = vlaneseq
    %v1438 = vshrl.u32 %v1437, 7
    %v1439 = vsub.s32 0, %v1438
    %v1440 = vrot.slane %v1383, %v1439
    %v1441 = vmul.f32 %v1433, %v1440
    %v1442 = vmul.f32 %v1434, %v1440
    %v1443 = vmul.f32 %v1435, %v1440
    %v1444 = vmul.f32 %v1436, %v1440
    %v1445 = vlaneseq
    %v1446 = vshrl.u32 %v1445, 7
    %v1447 = vsub.s32 1, %v1446
    %v1448 = vrot.slane %v1383, %v1447
    %v1449 = vadd.f32 %v1441, %v1448
    %v1450 = vadd.f32 %v1442, %v1448
    %v1451 = vadd.f32 %v1443, %v1448
    %v1452 = vadd.f32 %v1444, %v1448
    %v1453 = vlaneseq
    %v1454 = vshrl.u32 %v1453, 7
    %v1455 = vsub.s32 5, %v1454
    %v1456 = vrot.slane %v1383, %v1455
    %v1458 = vsel %vm162, %v1449, 0
    %v1461 = vsel %vm162, %v1450, 0
    %v1464 = vsel %vm162, %v1451, 0
    %v1467 = vsel %vm162, %v1452, 0
    %1469 = vmatprep.subr.mxu0 0.0
    %1470 = vmatpush1.msra.mxu0 %v1361
    %1471 = vmatprep.subr.mxu0 0.0
    %1472 = vmatpush1.msra.mxu0 %v1362
    %1473 = vmatprep.subr.mxu0 0.0
    %1474 = vmatpush1.msra.mxu0 %v1363
    %1475 = vmatprep.subr.mxu0 0.0
    %1476 = vmatpush1.msra.mxu0 %v1364
    %1477 = vmatprep.subr.mxu0 0.0
    %1478 = vmatpush1.msra.mxu0 0.0
    %1479 = vmatprep.subr.mxu0 0.0
    %1480 = vmatpush1.msra.mxu0 0.0
    %1481 = vmatprep.subr.mxu0 0.0
    %1482 = vmatpush1.msra.mxu0 0.0
    %1483 = vmatprep.subr.mxu0 0.0
    %1484 = vmatpush1.msra.mxu0 0.0
    %1485 = vmatprep.subr.mxu0 0.0
    %1486 = vmatpush1.msra.mxu0 0.0
    %1487 = vmatprep.subr.mxu0 0.0
    %1488 = vmatpush1.msra.mxu0 0.0
    %1489 = vmatprep.subr.mxu0 0.0
    %1490 = vmatpush1.msra.mxu0 0.0
    %1491 = vmatprep.subr.mxu0 0.0
    %1492 = vmatpush1.msra.mxu0 0.0
    %1493 = vmatprep.subr.mxu0 0.0
    %1494 = vmatpush1.msra.mxu0 0.0
    %1495 = vmatprep.subr.mxu0 0.0
    %1496 = vmatpush1.msra.mxu0 0.0
    %1497 = vmatprep.subr.mxu0 0.0
    %1498 = vmatpush1.msra.mxu0 0.0
    %1499 = vmatprep.subr.mxu0 0.0
    %1500 = vmatpush1.msra.mxu0 0.0
    %1501 = vmatprep.subr.mxu0 0.0
    %1502 = vmatpush1.msra.mxu0 0.0
    %1503 = vmatprep.subr.mxu0 0.0
    %1504 = vmatpush1.msra.mxu0 0.0
    %1505 = vmatprep.subr.mxu0 0.0
    %1506 = vmatpush1.msra.mxu0 0.0
    %1507 = vmatprep.subr.mxu0 0.0
    %1508 = vmatpush1.msra.mxu0 0.0
    %1509 = vmatprep.subr.mxu0 0.0
    %1510 = vmatpush1.msra.mxu0 0.0
    %1511 = vmatprep.subr.mxu0 0.0
    %1512 = vmatpush1.msra.mxu0 0.0
    %1513 = vmatprep.subr.mxu0 0.0
    %1514 = vmatpush1.msra.mxu0 0.0
    %1515 = vmatprep.subr.mxu0 0.0
    %1516 = vmatpush1.msra.mxu0 0.0
    %1517 = vmatprep.subr.mxu0 0.0
    %1518 = vmatpush1.msra.mxu0 0.0
    %1519 = vmatprep.subr.mxu0 0.0
    %1520 = vmatpush1.msra.mxu0 0.0
    %1521 = vmatprep.subr.mxu0 0.0
    %1522 = vmatpush1.msra.mxu0 0.0
    %1523 = vmatprep.subr.mxu0 0.0
    %1524 = vmatpush1.msra.mxu0 0.0
    %1525 = vmatprep.subr.mxu0 0.0
    %1526 = vmatpush1.msra.mxu0 0.0
    %1527 = vmatprep.subr.mxu0 0.0
    %1528 = vmatpush1.msra.mxu0 0.0
    %1529 = vmatprep.subr.mxu0 0.0
    %1530 = vmatpush1.msra.mxu0 0.0
    %1531 = vmatprep.subr.mxu0 0.0
    %1532 = vmatpush1.msra.mxu0 0.0
    %1533 = vmatprep.mubr.f32.mxu0 0.0
    %1534 = vmatmul.mubr.f32.gmra.mrb[0].mxu0 %v1458
    %v1535 = vpop.f32.mrb[0].mxu0
    %v1536 = vadd.f32 %v1456, %v1535
    %v1537 = vpop.f32.mrb[0].mxu0
    %1538 = vmatprep.mubr.f32.mxu0 0.0
    %1539 = vmatmul.mubr.f32.gmra.mrb[0].mxu0 %v1461
    %v1540 = vpop.f32.mrb[0].mxu0
    %v1541 = vadd.f32 %v1456, %v1540
    %v1542 = vpop.f32.mrb[0].mxu0
    %1543 = vmatprep.mubr.f32.mxu0 0.0
    %1544 = vmatmul.mubr.f32.gmra.mrb[0].mxu0 %v1464
    %v1545 = vpop.f32.mrb[0].mxu0
    %v1546 = vadd.f32 %v1456, %v1545
    %v1547 = vpop.f32.mrb[0].mxu0
    %1548 = vmatprep.mubr.f32.mxu0 0.0
    %1549 = vmatmul.mubr.f32.gmra.mrb[0].mxu0 %v1467
    %v1550 = vpop.f32.mrb[0].mxu0
    %v1551 = vadd.f32 %v1456, %v1550
    %v1552 = vpop.f32.mrb[0].mxu0
    %1553 = vdwg.mxu0
    %v1554 = vxor.u32 %v1536, 2147483648
    %v1555 = vxor.u32 %v1541, 2147483648
    %v1556 = vxor.u32 %v1546, 2147483648
    %v1557 = vxor.u32 %v1551, 2147483648
    %v1558 = vmul.f32 %v1554, 1.442695
    %v1559 = vpow.pop %v1558
    %v1560 = vmul.f32 %v1555, 1.442695
    %v1561 = vpow.pop %v1560
    %v1562 = vmul.f32 %v1556, 1.442695
    %v1563 = vpow.pop %v1562
    %v1564 = vmul.f32 %v1557, 1.442695
    %v1565 = vpow.pop %v1564
    %v1566 = vadd.f32 %v1559, 1.0
    %v1567 = vadd.f32 %v1561, 1.0
    %v1568 = vadd.f32 %v1563, 1.0
    %v1569 = vadd.f32 %v1565, 1.0
    %v1570 = vrcp.pop %v1566
    %v1571 = vmul.f32 1.0, %v1570
    %v1572 = vrcp.pop %v1567
    %v1573 = vmul.f32 1.0, %v1572
    %v1574 = vrcp.pop %v1568
    %v1575 = vmul.f32 1.0, %v1574
    %v1576 = vrcp.pop %v1569
    %v1577 = vmul.f32 1.0, %v1576
    %v1578 = vmul.f32 %v1571, 0.99
    %v1579 = vmul.f32 %v1573, 0.99
    %v1580 = vmul.f32 %v1575, 0.99
    %v1581 = vmul.f32 %v1577, 0.99
    %v1582 = vadd.f32 %v1578, 0.01
    %v1583 = vadd.f32 %v1579, 0.01
    %v1584 = vadd.f32 %v1580, 0.01
    %v1585 = vadd.f32 %v1581, 0.01
    %v1586 = vlaneseq
    %v1587 = vshrl.u32 %v1586, 7
    %v1588 = vsub.s32 4, %v1587
    %v1589 = vrot.slane %v1383, %v1588
    %1591 = vset.pattern.permute.xlu0 16
    %1592 = vperm.xlu0 %1591, %v1582
    %v1593 = vpop.permute.xlu0 %1592
    %1596 = vset.pattern.permute.xlu0 16
    %1597 = vperm.xlu0 %1596, %v1583
    %v1598 = vpop.permute.xlu0 %1597
    %1601 = vset.pattern.permute.xlu0 16
    %1602 = vperm.xlu0 %1601, %v1584
    %v1603 = vpop.permute.xlu0 %1602
    %1606 = vset.pattern.permute.xlu0 16
    %1607 = vperm.xlu0 %1606, %v1585
    %v1608 = vpop.permute.xlu0 %1607
    %v1610 = vmul.f32 %v1589, %v1593
    %v1611 = vmul.f32 %v1589, %v1598
    %v1612 = vmul.f32 %v1589, %v1603
    %v1613 = vmul.f32 %v1589, %v1608
    %v1614 = vmul.f32 %v1610, 1.442695
    %v1615 = vpow.pop %v1614
    %v1616 = vmul.f32 %v1611, 1.442695
    %v1617 = vpow.pop %v1616
    %v1618 = vmul.f32 %v1612, 1.442695
    %v1619 = vpow.pop %v1618
    %v1620 = vmul.f32 %v1613, 1.442695
    %v1621 = vpow.pop %v1620
    %1626 = vrot.lane.b32.xlu0 %v1536, 16
    %v1627 = vpop.permute.xlu0 %1626
    %1628 = vrot.lane.b32.xlu0 %v1541, 16
    %v1629 = vpop.permute.xlu0 %1628
    %1630 = vrot.lane.b32.xlu0 %v1546, 16
    %v1631 = vpop.permute.xlu0 %1630
    %1632 = vrot.lane.b32.xlu0 %v1551, 16
    %v1633 = vpop.permute.xlu0 %1632
    %v1638 = vsel %vm417, %v1615, %v1627
    %v1639 = vsel %vm417, %v1617, %v1629
    %v1640 = vsel %vm417, %v1619, %v1631
    %v1641 = vsel %vm417, %v1621, %v1633
    %v1643 = vrot.slane %v1641, 7
    %v1648 = vrot.slane %v1638, 7
    %v1649 = vrot.slane %v1639, 7
    %v1650 = vsel %vm428, %v1648, %v1649
    %v1651 = vrot.slane %v1640, 7
    %v1652 = vsel %vm428, %v1649, %v1651
    %v1653 = vsel %vm428, %v1651, %v1643
    %v1658 = vsel %vm428, %v1643, %v1648
    %v1659 = vmul.f32 %v1658, %v443
    %v1660 = vmul.f32 %v1650, %v448
    %v1661 = vmul.f32 %v1652, %v453
    %v1662 = vmul.f32 %v1653, %v458
    %v1663 = vadd.f32 %v1659, %v471
    %v1664 = vadd.f32 %v1660, %v476
    %v1665 = vadd.f32 %v1661, %v481
    %v1666 = vadd.f32 %v1662, %v486
    %v1667 = vmul.f32 %v1638, %v1663
    %v1668 = vmul.f32 %v1639, %v1664
    %v1669 = vmul.f32 %v1640, %v1665
    %v1670 = vmul.f32 %v1641, %v1666
    %1675 = vrot.lane.b32.xlu0 %v1659, 112
    %v1676 = vpop.permute.xlu0 %1675
    %1677 = vrot.lane.b32.xlu0 %v1660, 112
    %v1678 = vpop.permute.xlu0 %1677
    %1679 = vrot.lane.b32.xlu0 %v1661, 112
    %v1680 = vpop.permute.xlu0 %1679
    %1681 = vrot.lane.b32.xlu0 %v1662, 112
    %v1682 = vpop.permute.xlu0 %1681
    %v1687 = vmul.f32 %v1638, %v1676
    %v1688 = vmul.f32 %v1639, %v1678
    %v1689 = vmul.f32 %v1640, %v1680
    %v1690 = vmul.f32 %v1641, %v1682
    %1691 = vrot.lane.b32.xlu0 %v1638, 112
    %v1692 = vpop.permute.xlu0 %1691
    %1693 = vrot.lane.b32.xlu0 %v1639, 112
    %v1694 = vpop.permute.xlu0 %1693
    %1695 = vrot.lane.b32.xlu0 %v1640, 112
    %v1696 = vpop.permute.xlu0 %1695
    %1697 = vrot.lane.b32.xlu0 %v1641, 112
    %v1698 = vpop.permute.xlu0 %1697
    %v1703 = vadd.f32 %v1687, %v1692
    %v1704 = vadd.f32 %v1688, %v1694
    %v1705 = vadd.f32 %v1689, %v1696
    %v1706 = vadd.f32 %v1690, %v1698
    %1711 = vrot.lane.b32.xlu0 %v1703, 16
    %v1712 = vpop.permute.xlu0 %1711
    %1713 = vrot.lane.b32.xlu0 %v1704, 16
    %v1714 = vpop.permute.xlu0 %1713
    %1715 = vrot.lane.b32.xlu0 %v1705, 16
    %v1716 = vpop.permute.xlu0 %1715
    %1717 = vrot.lane.b32.xlu0 %v1706, 16
    %v1718 = vpop.permute.xlu0 %1717
    %v1723 = vsel %vm417, %v1667, %v1712
    %v1724 = vsel %vm417, %v1668, %v1714
    %v1725 = vsel %vm417, %v1669, %v1716
    %v1726 = vsel %vm417, %v1670, %v1718
    %v1728 = vrot.slane %v1726, 6
    %v1733 = vrot.slane %v1723, 6
    %v1734 = vrot.slane %v1724, 6
    %v1735 = vsel %vm558, %v1733, %v1734
    %v1736 = vrot.slane %v1725, 6
    %v1737 = vsel %vm558, %v1734, %v1736
    %v1738 = vsel %vm558, %v1736, %v1728
    %v1743 = vsel %vm558, %v1728, %v1733
    %v1744 = vmul.f32 %v1743, %v572
    %v1745 = vmul.f32 %v1735, %v576
    %v1746 = vmul.f32 %v1737, %v580
    %v1747 = vmul.f32 %v1738, %v584
    %v1748 = vadd.f32 %v1744, %v592
    %v1749 = vadd.f32 %v1745, %v596
    %v1750 = vadd.f32 %v1746, %v600
    %v1751 = vadd.f32 %v1747, %v604
    %v1752 = vmul.f32 %v1723, %v1748
    %v1753 = vmul.f32 %v1724, %v1749
    %v1754 = vmul.f32 %v1725, %v1750
    %v1755 = vmul.f32 %v1726, %v1751
    %1760 = vrot.lane.b32.xlu0 %v1744, 112
    %v1761 = vpop.permute.xlu0 %1760
    %1762 = vrot.lane.b32.xlu0 %v1745, 112
    %v1763 = vpop.permute.xlu0 %1762
    %1764 = vrot.lane.b32.xlu0 %v1746, 112
    %v1765 = vpop.permute.xlu0 %1764
    %1766 = vrot.lane.b32.xlu0 %v1747, 112
    %v1767 = vpop.permute.xlu0 %1766
    %v1772 = vmul.f32 %v1723, %v1761
    %v1773 = vmul.f32 %v1724, %v1763
    %v1774 = vmul.f32 %v1725, %v1765
    %v1775 = vmul.f32 %v1726, %v1767
    %1776 = vrot.lane.b32.xlu0 %v1723, 112
    %v1777 = vpop.permute.xlu0 %1776
    %1778 = vrot.lane.b32.xlu0 %v1724, 112
    %v1779 = vpop.permute.xlu0 %1778
    %1780 = vrot.lane.b32.xlu0 %v1725, 112
    %v1781 = vpop.permute.xlu0 %1780
    %1782 = vrot.lane.b32.xlu0 %v1726, 112
    %v1783 = vpop.permute.xlu0 %1782
    %v1788 = vadd.f32 %v1772, %v1777
    %v1789 = vadd.f32 %v1773, %v1779
    %v1790 = vadd.f32 %v1774, %v1781
    %v1791 = vadd.f32 %v1775, %v1783
    %1796 = vrot.lane.b32.xlu0 %v1788, 16
    %v1797 = vpop.permute.xlu0 %1796
    %1798 = vrot.lane.b32.xlu0 %v1789, 16
    %v1799 = vpop.permute.xlu0 %1798
    %1800 = vrot.lane.b32.xlu0 %v1790, 16
    %v1801 = vpop.permute.xlu0 %1800
    %1802 = vrot.lane.b32.xlu0 %v1791, 16
    %v1803 = vpop.permute.xlu0 %1802
    %v1808 = vsel %vm417, %v1752, %v1797
    %v1809 = vsel %vm417, %v1753, %v1799
    %v1810 = vsel %vm417, %v1754, %v1801
    %v1811 = vsel %vm417, %v1755, %v1803
    %v1813 = vrot.slane %v1811, 4
    %v1818 = vrot.slane %v1808, 4
    %v1819 = vrot.slane %v1809, 4
    %v1820 = vsel %vm676, %v1818, %v1819
    %v1821 = vrot.slane %v1810, 4
    %v1822 = vsel %vm676, %v1819, %v1821
    %v1823 = vsel %vm676, %v1821, %v1813
    %v1828 = vsel %vm676, %v1813, %v1818
    %v1829 = vmul.f32 %v1828, %v690
    %v1830 = vmul.f32 %v1820, %v694
    %v1831 = vmul.f32 %v1822, %v698
    %v1832 = vmul.f32 %v1823, %v702
    %v1833 = vadd.f32 %v1829, %v710
    %v1834 = vadd.f32 %v1830, %v714
    %v1835 = vadd.f32 %v1831, %v718
    %v1836 = vadd.f32 %v1832, %v722
    %v1837 = vmul.f32 %v1808, %v1833
    %v1838 = vmul.f32 %v1809, %v1834
    %v1839 = vmul.f32 %v1810, %v1835
    %v1840 = vmul.f32 %v1811, %v1836
    %1845 = vrot.lane.b32.xlu0 %v1829, 112
    %v1846 = vpop.permute.xlu0 %1845
    %1847 = vrot.lane.b32.xlu0 %v1830, 112
    %v1848 = vpop.permute.xlu0 %1847
    %1849 = vrot.lane.b32.xlu0 %v1831, 112
    %v1850 = vpop.permute.xlu0 %1849
    %1851 = vrot.lane.b32.xlu0 %v1832, 112
    %v1852 = vpop.permute.xlu0 %1851
    %v1857 = vmul.f32 %v1808, %v1846
    %v1858 = vmul.f32 %v1809, %v1848
    %v1859 = vmul.f32 %v1810, %v1850
    %v1860 = vmul.f32 %v1811, %v1852
    %1861 = vrot.lane.b32.xlu0 %v1808, 112
    %v1862 = vpop.permute.xlu0 %1861
    %1863 = vrot.lane.b32.xlu0 %v1809, 112
    %v1864 = vpop.permute.xlu0 %1863
    %1865 = vrot.lane.b32.xlu0 %v1810, 112
    %v1866 = vpop.permute.xlu0 %1865
    %1867 = vrot.lane.b32.xlu0 %v1811, 112
    %v1868 = vpop.permute.xlu0 %1867
    %v1873 = vadd.f32 %v1857, %v1862
    %v1874 = vadd.f32 %v1858, %v1864
    %v1875 = vadd.f32 %v1859, %v1866
    %v1876 = vadd.f32 %v1860, %v1868
    %1881 = vrot.lane.b32.xlu0 %v1873, 16
    %v1882 = vpop.permute.xlu0 %1881
    %1883 = vrot.lane.b32.xlu0 %v1874, 16
    %v1884 = vpop.permute.xlu0 %1883
    %1885 = vrot.lane.b32.xlu0 %v1875, 16
    %v1886 = vpop.permute.xlu0 %1885
    %1887 = vrot.lane.b32.xlu0 %v1876, 16
    %v1888 = vpop.permute.xlu0 %1887
    %v1893 = vsel %vm417, %v1837, %v1882
    %v1894 = vsel %vm417, %v1838, %v1884
    %v1895 = vsel %vm417, %v1839, %v1886
    %v1896 = vsel %vm417, %v1840, %v1888
    %v1897 = vmul.f32 %v1896, %v790
    %v1898 = vmul.f32 %v1893, %v794
    %v1899 = vmul.f32 %v1894, %v798
    %v1900 = vmul.f32 %v1895, %v802
    %v1901 = vadd.f32 %v1897, %v810
    %v1902 = vadd.f32 %v1898, %v814
    %v1903 = vadd.f32 %v1899, %v818
    %v1904 = vadd.f32 %v1900, %v822
    %v1905 = vmul.f32 %v1893, %v1901
    %v1906 = vmul.f32 %v1894, %v1902
    %v1907 = vmul.f32 %v1895, %v1903
    %v1908 = vmul.f32 %v1896, %v1904
    %1913 = vrot.lane.b32.xlu0 %v1897, 112
    %v1914 = vpop.permute.xlu0 %1913
    %1915 = vrot.lane.b32.xlu0 %v1898, 112
    %v1916 = vpop.permute.xlu0 %1915
    %1917 = vrot.lane.b32.xlu0 %v1899, 112
    %v1918 = vpop.permute.xlu0 %1917
    %1919 = vrot.lane.b32.xlu0 %v1900, 112
    %v1920 = vpop.permute.xlu0 %1919
    %v1925 = vmul.f32 %v1893, %v1914
    %v1926 = vmul.f32 %v1894, %v1916
    %v1927 = vmul.f32 %v1895, %v1918
    %v1928 = vmul.f32 %v1896, %v1920
    %1933 = vrot.lane.b32.xlu0 %v1893, 112
    %v1934 = vpop.permute.xlu0 %1933
    %1935 = vrot.lane.b32.xlu0 %v1894, 112
    %v1936 = vpop.permute.xlu0 %1935
    %1937 = vrot.lane.b32.xlu0 %v1895, 112
    %v1938 = vpop.permute.xlu0 %1937
    %1939 = vrot.lane.b32.xlu0 %v1896, 112
    %v1940 = vpop.permute.xlu0 %1939
    %v1945 = vadd.f32 %v1925, %v1934
    %v1946 = vadd.f32 %v1926, %v1936
    %v1947 = vadd.f32 %v1927, %v1938
    %v1948 = vadd.f32 %v1928, %v1940
    %1953 = vrot.lane.b32.xlu0 %v1945, 16
    %v1954 = vpop.permute.xlu0 %1953
    %1955 = vrot.lane.b32.xlu0 %v1946, 16
    %v1956 = vpop.permute.xlu0 %1955
    %1957 = vrot.lane.b32.xlu0 %v1947, 16
    %v1958 = vpop.permute.xlu0 %1957
    %1959 = vrot.lane.b32.xlu0 %v1948, 16
    %v1960 = vpop.permute.xlu0 %1959
    %v1965 = vsel %vm417, %v1905, %v1954
    %v1966 = vsel %vm417, %v1906, %v1956
    %v1967 = vsel %vm417, %v1907, %v1958
    %v1968 = vsel %vm417, %v1908, %v1960
    %1973 = vrot.lane.b32.xlu0 %v1965, 112
    %v1974 = vpop.permute.xlu0 %1973
    %1975 = vrot.lane.b32.xlu0 %v1966, 112
    %v1976 = vpop.permute.xlu0 %1975
    %1977 = vrot.lane.b32.xlu0 %v1967, 112
    %v1978 = vpop.permute.xlu0 %1977
    %1979 = vrot.lane.b32.xlu0 %v1968, 112
    %v1980 = vpop.permute.xlu0 %1979
    %1985 = vrot.lane.b32.xlu0 %v1449, 16
    %v1986 = vpop.permute.xlu0 %1985
    %1987 = vrot.lane.b32.xlu0 %v1450, 16
    %v1988 = vpop.permute.xlu0 %1987
    %1989 = vrot.lane.b32.xlu0 %v1451, 16
    %v1990 = vpop.permute.xlu0 %1989
    %1991 = vrot.lane.b32.xlu0 %v1452, 16
    %v1992 = vpop.permute.xlu0 %1991
    %v1997 = vsel %vm417, %v1974, %v1986
    %v1998 = vsel %vm417, %v1976, %v1988
    %v1999 = vsel %vm417, %v1978, %v1990
    %v2000 = vsel %vm417, %v1980, %v1992
    %v2002 = vsel %vm924, %v1997, 0
    %v2005 = vsel %vm924, %v1998, 0
    %v2008 = vsel %vm924, %v1999, 0
    %v2011 = vsel %vm924, %v2000, 0
    %2013 = vmatprep.subr.mxu0 0.0
    %2014 = vmatpush1.msra.mxu0 %v1365
    %2015 = vmatprep.subr.mxu0 0.0
    %2016 = vmatpush1.msra.mxu0 %v1366
    %2017 = vmatprep.subr.mxu0 0.0
    %2018 = vmatpush1.msra.mxu0 %v1367
    %2019 = vmatprep.subr.mxu0 0.0
    %2020 = vmatpush1.msra.mxu0 %v1368
    %2021 = vmatprep.subr.mxu0 0.0
    %2022 = vmatpush1.msra.mxu0 %v1369
    %2023 = vmatprep.subr.mxu0 0.0
    %2024 = vmatpush1.msra.mxu0 %v1370
    %2025 = vmatprep.subr.mxu0 0.0
    %2026 = vmatpush1.msra.mxu0 0.0
    %2027 = vmatprep.subr.mxu0 0.0
    %2028 = vmatpush1.msra.mxu0 0.0
    %2029 = vmatprep.subr.mxu0 0.0
    %2030 = vmatpush1.msra.mxu0 0.0
    %2031 = vmatprep.subr.mxu0 0.0
    %2032 = vmatpush1.msra.mxu0 0.0
    %2033 = vmatprep.subr.mxu0 0.0
    %2034 = vmatpush1.msra.mxu0 0.0
    %2035 = vmatprep.subr.mxu0 0.0
    %2036 = vmatpush1.msra.mxu0 0.0
    %2037 = vmatprep.subr.mxu0 0.0
    %2038 = vmatpush1.msra.mxu0 0.0
    %2039 = vmatprep.subr.mxu0 0.0
    %2040 = vmatpush1.msra.mxu0 0.0
    %2041 = vmatprep.subr.mxu0 0.0
    %2042 = vmatpush1.msra.mxu0 0.0
    %2043 = vmatprep.subr.mxu0 0.0
    %2044 = vmatpush1.msra.mxu0 0.0
    %2045 = vmatprep.subr.mxu0 0.0
    %2046 = vmatpush1.msra.mxu0 0.0
    %2047 = vmatprep.subr.mxu0 0.0
    %2048 = vmatpush1.msra.mxu0 0.0
    %2049 = vmatprep.subr.mxu0 0.0
    %2050 = vmatpush1.msra.mxu0 0.0
    %2051 = vmatprep.subr.mxu0 0.0
    %2052 = vmatpush1.msra.mxu0 0.0
    %2053 = vmatprep.subr.mxu0 0.0
    %2054 = vmatpush1.msra.mxu0 0.0
    %2055 = vmatprep.subr.mxu0 0.0
    %2056 = vmatpush1.msra.mxu0 0.0
    %2057 = vmatprep.subr.mxu0 0.0
    %2058 = vmatpush1.msra.mxu0 0.0
    %2059 = vmatprep.subr.mxu0 0.0
    %2060 = vmatpush1.msra.mxu0 0.0
    %2061 = vmatprep.subr.mxu0 0.0
    %2062 = vmatpush1.msra.mxu0 0.0
    %2063 = vmatprep.subr.mxu0 0.0
    %2064 = vmatpush1.msra.mxu0 0.0
    %2065 = vmatprep.subr.mxu0 0.0
    %2066 = vmatpush1.msra.mxu0 0.0
    %2067 = vmatprep.subr.mxu0 0.0
    %2068 = vmatpush1.msra.mxu0 0.0
    %2069 = vmatprep.subr.mxu0 0.0
    %2070 = vmatpush1.msra.mxu0 0.0
    %2071 = vmatprep.subr.mxu0 0.0
    %2072 = vmatpush1.msra.mxu0 0.0
    %2073 = vmatprep.subr.mxu0 0.0
    %2074 = vmatpush1.msra.mxu0 0.0
    %2075 = vmatprep.subr.mxu0 0.0
    %2076 = vmatpush1.msra.mxu0 0.0
    %2077 = vmatprep.mubr.f32.mxu0 0.0
    %2078 = vmatmul.mubr.f32.gmra.mrb[0].mxu0 %v2002
    %v2079 = vpop.f32.mrb[0].mxu0
    %v2080 = vadd.f32 0.0, %v2079
    %v2081 = vpop.f32.mrb[0].mxu0
    %2082 = vmatprep.mubr.f32.mxu0 0.0
    %2083 = vmatmul.mubr.f32.gmra.mrb[0].mxu0 %v2005
    %v2084 = vpop.f32.mrb[0].mxu0
    %v2085 = vadd.f32 0.0, %v2084
    %v2086 = vpop.f32.mrb[0].mxu0
    %2087 = vmatprep.mubr.f32.mxu0 0.0
    %2088 = vmatmul.mubr.f32.gmra.mrb[0].mxu0 %v2008
    %v2089 = vpop.f32.mrb[0].mxu0
    %v2090 = vadd.f32 0.0, %v2089
    %v2091 = vpop.f32.mrb[0].mxu0
    %2092 = vmatprep.mubr.f32.mxu0 0.0
    %2093 = vmatmul.mubr.f32.gmra.mrb[0].mxu0 %v2011
    %v2094 = vpop.f32.mrb[0].mxu0
    %v2095 = vadd.f32 0.0, %v2094
    %v2096 = vpop.f32.mrb[0].mxu0
    %2097 = vdwg.mxu0
    %v2098 = vlaneseq
    %v2099 = vshrl.u32 %v2098, 7
    %v2100 = vsub.s32 6, %v2099
    %v2101 = vrot.slane %v1383, %v2100
    %v2102 = vadd.f32 %v2080, %v2101
    %v2103 = vadd.f32 %v2085, %v2101
    %v2104 = vadd.f32 %v2090, %v2101
    %v2105 = vadd.f32 %v2095, %v2101
    %v2106 = vadd.f32 %v1356, %v2102
    %v2107 = vadd.f32 %v1357, %v2103
    %v2108 = vadd.f32 %v1358, %v2104
    %v2109 = vadd.f32 %v1359, %v2105
    %v2110 = vsel %vm162, %v2106, 0.0
    %2111 = vadd.xlane.f32.xlu0 %v2110
    %v2112 = vpop.xlane.xlu0 %2111
    %v2113 = vsel %vm162, %v2107, 0.0
    %2114 = vadd.xlane.f32.xlu0 %v2113
    %v2115 = vpop.xlane.xlu0 %2114
    %v2116 = vsel %vm162, %v2108, 0.0
    %2117 = vadd.xlane.f32.xlu0 %v2116
    %v2118 = vpop.xlane.xlu0 %2117
    %v2119 = vsel %vm162, %v2109, 0.0
    %2120 = vadd.xlane.f32.xlu0 %v2119
    %v2121 = vpop.xlane.xlu0 %2120
    %v2122 = vmul.f32 %v2112, %v175
    %v2123 = vmul.f32 %v2115, %v175
    %v2124 = vmul.f32 %v2118, %v175
    %v2125 = vmul.f32 %v2121, %v175
    %v2126 = vsub.f32 %v2106, %v2122
    %v2127 = vsub.f32 %v2107, %v2123
    %v2128 = vsub.f32 %v2108, %v2124
    %v2129 = vsub.f32 %v2109, %v2125
    %v2130 = vmul.f32 %v2126, %v2126
    %v2131 = vmul.f32 %v2127, %v2127
    %v2132 = vmul.f32 %v2128, %v2128
    %v2133 = vmul.f32 %v2129, %v2129
    %v2134 = vsel %vm162, %v2130, 0.0
    %2135 = vadd.xlane.f32.xlu0 %v2134
    %v2136 = vpop.xlane.xlu0 %2135
    %v2137 = vsel %vm162, %v2131, 0.0
    %2138 = vadd.xlane.f32.xlu0 %v2137
    %v2139 = vpop.xlane.xlu0 %2138
    %v2140 = vsel %vm162, %v2132, 0.0
    %2141 = vadd.xlane.f32.xlu0 %v2140
    %v2142 = vpop.xlane.xlu0 %2141
    %v2143 = vsel %vm162, %v2133, 0.0
    %2144 = vadd.xlane.f32.xlu0 %v2143
    %v2145 = vpop.xlane.xlu0 %2144
    %v2146 = vmul.f32 %v2136, %v175
    %v2147 = vmul.f32 %v2139, %v175
    %v2148 = vmul.f32 %v2142, %v175
    %v2149 = vmul.f32 %v2145, %v175
    %v2150 = vadd.f32 %v2146, 1e-05
    %v2151 = vadd.f32 %v2147, 1e-05
    %v2152 = vadd.f32 %v2148, 1e-05
    %v2153 = vadd.f32 %v2149, 1e-05
    %v2154 = vrsqrt.pop %v2150
    %v2155 = vrsqrt.pop %v2151
    %v2156 = vrsqrt.pop %v2152
    %v2157 = vrsqrt.pop %v2153
    %v2158 = vmul.f32 %v2126, %v2154
    %v2159 = vmul.f32 %v2127, %v2155
    %v2160 = vmul.f32 %v2128, %v2156
    %v2161 = vmul.f32 %v2129, %v2157
    %v2162 = vlaneseq
    %v2163 = vshrl.u32 %v2162, 7
    %v2164 = vsub.s32 2, %v2163
    %v2165 = vrot.slane %v1383, %v2164
    %v2166 = vmul.f32 %v2158, %v2165
    %v2167 = vmul.f32 %v2159, %v2165
    %v2168 = vmul.f32 %v2160, %v2165
    %v2169 = vmul.f32 %v2161, %v2165
    %v2170 = vlaneseq
    %v2171 = vshrl.u32 %v2170, 7
    %v2172 = vsub.s32 3, %v2171
    %v2173 = vrot.slane %v1383, %v2172
    %v2174 = vadd.f32 %v2166, %v2173
    %v2175 = vadd.f32 %v2167, %v2173
    %v2176 = vadd.f32 %v2168, %v2173
    %v2177 = vadd.f32 %v2169, %v2173
    %v2178 = vlaneseq
    %v2179 = vshrl.u32 %v2178, 7
    %v2180 = vsub.s32 7, %v2179
    %v2181 = vrot.slane %v1383, %v2180
    %v2183 = vsel %vm162, %v2174, 0
    %v2186 = vsel %vm162, %v2175, 0
    %v2189 = vsel %vm162, %v2176, 0
    %v2192 = vsel %vm162, %v2177, 0
    %2194 = vmatprep.subr.mxu0 0.0
    %2195 = vmatpush1.msra.mxu0 %v1371
    %2196 = vmatprep.subr.mxu0 0.0
    %2197 = vmatpush1.msra.mxu0 %v1372
    %2198 = vmatprep.subr.mxu0 0.0
    %2199 = vmatpush1.msra.mxu0 %v1373
    %2200 = vmatprep.subr.mxu0 0.0
    %2201 = vmatpush1.msra.mxu0 %v1374
    %2202 = vmatprep.subr.mxu0 0.0
    %2203 = vmatpush1.msra.mxu0 0.0
    %2204 = vmatprep.subr.mxu0 0.0
    %2205 = vmatpush1.msra.mxu0 0.0
    %2206 = vmatprep.subr.mxu0 0.0
    %2207 = vmatpush1.msra.mxu0 0.0
    %2208 = vmatprep.subr.mxu0 0.0
    %2209 = vmatpush1.msra.mxu0 0.0
    %2210 = vmatprep.subr.mxu0 0.0
    %2211 = vmatpush1.msra.mxu0 0.0
    %2212 = vmatprep.subr.mxu0 0.0
    %2213 = vmatpush1.msra.mxu0 0.0
    %2214 = vmatprep.subr.mxu0 0.0
    %2215 = vmatpush1.msra.mxu0 0.0
    %2216 = vmatprep.subr.mxu0 0.0
    %2217 = vmatpush1.msra.mxu0 0.0
    %2218 = vmatprep.subr.mxu0 0.0
    %2219 = vmatpush1.msra.mxu0 0.0
    %2220 = vmatprep.subr.mxu0 0.0
    %2221 = vmatpush1.msra.mxu0 0.0
    %2222 = vmatprep.subr.mxu0 0.0
    %2223 = vmatpush1.msra.mxu0 0.0
    %2224 = vmatprep.subr.mxu0 0.0
    %2225 = vmatpush1.msra.mxu0 0.0
    %2226 = vmatprep.subr.mxu0 0.0
    %2227 = vmatpush1.msra.mxu0 0.0
    %2228 = vmatprep.subr.mxu0 0.0
    %2229 = vmatpush1.msra.mxu0 0.0
    %2230 = vmatprep.subr.mxu0 0.0
    %2231 = vmatpush1.msra.mxu0 0.0
    %2232 = vmatprep.subr.mxu0 0.0
    %2233 = vmatpush1.msra.mxu0 0.0
    %2234 = vmatprep.subr.mxu0 0.0
    %2235 = vmatpush1.msra.mxu0 0.0
    %2236 = vmatprep.subr.mxu0 0.0
    %2237 = vmatpush1.msra.mxu0 0.0
    %2238 = vmatprep.subr.mxu0 0.0
    %2239 = vmatpush1.msra.mxu0 0.0
    %2240 = vmatprep.subr.mxu0 0.0
    %2241 = vmatpush1.msra.mxu0 0.0
    %2242 = vmatprep.subr.mxu0 0.0
    %2243 = vmatpush1.msra.mxu0 0.0
    %2244 = vmatprep.subr.mxu0 0.0
    %2245 = vmatpush1.msra.mxu0 0.0
    %2246 = vmatprep.subr.mxu0 0.0
    %2247 = vmatpush1.msra.mxu0 0.0
    %2248 = vmatprep.subr.mxu0 0.0
    %2249 = vmatpush1.msra.mxu0 0.0
    %2250 = vmatprep.subr.mxu0 0.0
    %2251 = vmatpush1.msra.mxu0 0.0
    %2252 = vmatprep.subr.mxu0 0.0
    %2253 = vmatpush1.msra.mxu0 0.0
    %2254 = vmatprep.subr.mxu0 0.0
    %2255 = vmatpush1.msra.mxu0 0.0
    %2256 = vmatprep.subr.mxu0 0.0
    %2257 = vmatpush1.msra.mxu0 0.0
    %2258 = vmatprep.mubr.f32.mxu0 0.0
    %2259 = vmatmul.mubr.f32.gmra.mrb[0].mxu0 %v2183
    %v2260 = vpop.f32.mrb[0].mxu0
    %v2261 = vadd.f32 %v2181, %v2260
    %v2262 = vpop.f32.mrb[0].mxu0
    %2263 = vmatprep.mubr.f32.mxu0 0.0
    %2264 = vmatmul.mubr.f32.gmra.mrb[0].mxu0 %v2186
    %v2265 = vpop.f32.mrb[0].mxu0
    %v2266 = vadd.f32 %v2181, %v2265
    %v2267 = vpop.f32.mrb[0].mxu0
    %2268 = vmatprep.mubr.f32.mxu0 0.0
    %2269 = vmatmul.mubr.f32.gmra.mrb[0].mxu0 %v2189
    %v2270 = vpop.f32.mrb[0].mxu0
    %v2271 = vadd.f32 %v2181, %v2270
    %v2272 = vpop.f32.mrb[0].mxu0
    %2273 = vmatprep.mubr.f32.mxu0 0.0
    %2274 = vmatmul.mubr.f32.gmra.mrb[0].mxu0 %v2192
    %v2275 = vpop.f32.mrb[0].mxu0
    %v2276 = vadd.f32 %v2181, %v2275
    %v2277 = vpop.f32.mrb[0].mxu0
    %2278 = vdwg.mxu0
    %v2279 = vxor.u32 %v2261, 2147483648
    %v2280 = vxor.u32 %v2266, 2147483648
    %v2281 = vxor.u32 %v2271, 2147483648
    %v2282 = vxor.u32 %v2276, 2147483648
    %v2283 = vmul.f32 %v2279, 1.442695
    %v2284 = vpow.pop %v2283
    %v2285 = vmul.f32 %v2280, 1.442695
    %v2286 = vpow.pop %v2285
    %v2287 = vmul.f32 %v2281, 1.442695
    %v2288 = vpow.pop %v2287
    %v2289 = vmul.f32 %v2282, 1.442695
    %v2290 = vpow.pop %v2289
    %v2291 = vadd.f32 %v2284, 1.0
    %v2292 = vadd.f32 %v2286, 1.0
    %v2293 = vadd.f32 %v2288, 1.0
    %v2294 = vadd.f32 %v2290, 1.0
    %v2295 = vrcp.pop %v2291
    %v2296 = vmul.f32 1.0, %v2295
    %v2297 = vrcp.pop %v2292
    %v2298 = vmul.f32 1.0, %v2297
    %v2299 = vrcp.pop %v2293
    %v2300 = vmul.f32 1.0, %v2299
    %v2301 = vrcp.pop %v2294
    %v2302 = vmul.f32 1.0, %v2301
    %v2303 = vmul.f32 %v2261, %v2296
    %v2304 = vmul.f32 %v2266, %v2298
    %v2305 = vmul.f32 %v2271, %v2300
    %v2306 = vmul.f32 %v2276, %v2302
    %2311 = vrot.lane.b32.xlu0 %v2303, 64
    %v2312 = vpop.permute.xlu0 %2311
    %2313 = vrot.lane.b32.xlu0 %v2304, 64
    %v2314 = vpop.permute.xlu0 %2313
    %2315 = vrot.lane.b32.xlu0 %v2305, 64
    %v2316 = vpop.permute.xlu0 %2315
    %2317 = vrot.lane.b32.xlu0 %v2306, 64
    %v2318 = vpop.permute.xlu0 %2317
    %v2323 = vmul.f32 %v2261, %v2312
    %v2324 = vmul.f32 %v2266, %v2314
    %v2325 = vmul.f32 %v2271, %v2316
    %v2326 = vmul.f32 %v2276, %v2318
    %v2328 = vsel %vm36, %v2323, 0
    %v2331 = vsel %vm36, %v2324, 0
    %v2334 = vsel %vm36, %v2325, 0
    %v2337 = vsel %vm36, %v2326, 0
    %2339 = vmatprep.subr.mxu0 0.0
    %2340 = vmatpush1.msra.mxu0 %v1375
    %2341 = vmatprep.subr.mxu0 0.0
    %2342 = vmatpush1.msra.mxu0 %v1376
    %2343 = vmatprep.subr.mxu0 0.0
    %2344 = vmatpush1.msra.mxu0 %v1377
    %2345 = vmatprep.subr.mxu0 0.0
    %2346 = vmatpush1.msra.mxu0 %v1378
    %2347 = vmatprep.subr.mxu0 0.0
    %2348 = vmatpush1.msra.mxu0 %v1379
    %2349 = vmatprep.subr.mxu0 0.0
    %2350 = vmatpush1.msra.mxu0 %v1380
    %2351 = vmatprep.subr.mxu0 0.0
    %2352 = vmatpush1.msra.mxu0 %v1381
    %2353 = vmatprep.subr.mxu0 0.0
    %2354 = vmatpush1.msra.mxu0 %v1382
    %2355 = vmatprep.subr.mxu0 0.0
    %2356 = vmatpush1.msra.mxu0 0.0
    %2357 = vmatprep.subr.mxu0 0.0
    %2358 = vmatpush1.msra.mxu0 0.0
    %2359 = vmatprep.subr.mxu0 0.0
    %2360 = vmatpush1.msra.mxu0 0.0
    %2361 = vmatprep.subr.mxu0 0.0
    %2362 = vmatpush1.msra.mxu0 0.0
    %2363 = vmatprep.subr.mxu0 0.0
    %2364 = vmatpush1.msra.mxu0 0.0
    %2365 = vmatprep.subr.mxu0 0.0
    %2366 = vmatpush1.msra.mxu0 0.0
    %2367 = vmatprep.subr.mxu0 0.0
    %2368 = vmatpush1.msra.mxu0 0.0
    %2369 = vmatprep.subr.mxu0 0.0
    %2370 = vmatpush1.msra.mxu0 0.0
    %2371 = vmatprep.subr.mxu0 0.0
    %2372 = vmatpush1.msra.mxu0 0.0
    %2373 = vmatprep.subr.mxu0 0.0
    %2374 = vmatpush1.msra.mxu0 0.0
    %2375 = vmatprep.subr.mxu0 0.0
    %2376 = vmatpush1.msra.mxu0 0.0
    %2377 = vmatprep.subr.mxu0 0.0
    %2378 = vmatpush1.msra.mxu0 0.0
    %2379 = vmatprep.subr.mxu0 0.0
    %2380 = vmatpush1.msra.mxu0 0.0
    %2381 = vmatprep.subr.mxu0 0.0
    %2382 = vmatpush1.msra.mxu0 0.0
    %2383 = vmatprep.subr.mxu0 0.0
    %2384 = vmatpush1.msra.mxu0 0.0
    %2385 = vmatprep.subr.mxu0 0.0
    %2386 = vmatpush1.msra.mxu0 0.0
    %2387 = vmatprep.subr.mxu0 0.0
    %2388 = vmatpush1.msra.mxu0 0.0
    %2389 = vmatprep.subr.mxu0 0.0
    %2390 = vmatpush1.msra.mxu0 0.0
    %2391 = vmatprep.subr.mxu0 0.0
    %2392 = vmatpush1.msra.mxu0 0.0
    %2393 = vmatprep.subr.mxu0 0.0
    %2394 = vmatpush1.msra.mxu0 0.0
    %2395 = vmatprep.subr.mxu0 0.0
    %2396 = vmatpush1.msra.mxu0 0.0
    %2397 = vmatprep.subr.mxu0 0.0
    %2398 = vmatpush1.msra.mxu0 0.0
    %2399 = vmatprep.subr.mxu0 0.0
    %2400 = vmatpush1.msra.mxu0 0.0
    %2401 = vmatprep.subr.mxu0 0.0
    %2402 = vmatpush1.msra.mxu0 0.0
    %2403 = vmatprep.mubr.f32.mxu0 0.0
    %2404 = vmatmul.mubr.f32.gmra.mrb[0].mxu0 %v2328
    %v2405 = vpop.f32.mrb[0].mxu0
    %v2406 = vadd.f32 0.0, %v2405
    %v2407 = vpop.f32.mrb[0].mxu0
    %2408 = vmatprep.mubr.f32.mxu0 0.0
    %2409 = vmatmul.mubr.f32.gmra.mrb[0].mxu0 %v2331
    %v2410 = vpop.f32.mrb[0].mxu0
    %v2411 = vadd.f32 0.0, %v2410
    %v2412 = vpop.f32.mrb[0].mxu0
    %2413 = vmatprep.mubr.f32.mxu0 0.0
    %2414 = vmatmul.mubr.f32.gmra.mrb[0].mxu0 %v2334
    %v2415 = vpop.f32.mrb[0].mxu0
    %v2416 = vadd.f32 0.0, %v2415
    %v2417 = vpop.f32.mrb[0].mxu0
    %2418 = vmatprep.mubr.f32.mxu0 0.0
    %2419 = vmatmul.mubr.f32.gmra.mrb[0].mxu0 %v2337
    %v2420 = vpop.f32.mrb[0].mxu0
    %v2421 = vadd.f32 0.0, %v2420
    %v2422 = vpop.f32.mrb[0].mxu0
    %2423 = vdwg.mxu0
    %v2424 = vadd.f32 %v2106, %v2406
    %v2425 = vadd.f32 %v2107, %v2411
    %v2426 = vadd.f32 %v2108, %v2416
    %v2427 = vadd.f32 %v2109, %v2421
    %v2428 = vlaneseq
    %v2429 = vshrl.u32 %v2428, 7
    %v2430 = vsub.s32 0, %v2429
    %v2431 = vrot.slane %v1384, %v2430
    %v2432 = vadd.f32 %v2424, %v2431
    %v2433 = vadd.f32 %v2425, %v2431
    %v2434 = vadd.f32 %v2426, %v2431
    %v2435 = vadd.f32 %v2427, %v2431
    %v2436 = vsel %vm162, %v2432, 0.0
    %2437 = vadd.xlane.f32.xlu0 %v2436
    %v2438 = vpop.xlane.xlu0 %2437
    %v2439 = vsel %vm162, %v2433, 0.0
    %2440 = vadd.xlane.f32.xlu0 %v2439
    %v2441 = vpop.xlane.xlu0 %2440
    %v2442 = vsel %vm162, %v2434, 0.0
    %2443 = vadd.xlane.f32.xlu0 %v2442
    %v2444 = vpop.xlane.xlu0 %2443
    %v2445 = vsel %vm162, %v2435, 0.0
    %2446 = vadd.xlane.f32.xlu0 %v2445
    %v2447 = vpop.xlane.xlu0 %2446
    %v2448 = vmul.f32 %v2438, %v175
    %v2449 = vmul.f32 %v2441, %v175
    %v2450 = vmul.f32 %v2444, %v175
    %v2451 = vmul.f32 %v2447, %v175
    %v2452 = vsub.f32 %v2432, %v2448
    %v2453 = vsub.f32 %v2433, %v2449
    %v2454 = vsub.f32 %v2434, %v2450
    %v2455 = vsub.f32 %v2435, %v2451
    %v2456 = vmul.f32 %v2452, %v2452
    %v2457 = vmul.f32 %v2453, %v2453
    %v2458 = vmul.f32 %v2454, %v2454
    %v2459 = vmul.f32 %v2455, %v2455
    %v2460 = vsel %vm162, %v2456, 0.0
    %2461 = vadd.xlane.f32.xlu0 %v2460
    %v2462 = vpop.xlane.xlu0 %2461
    %v2463 = vsel %vm162, %v2457, 0.0
    %2464 = vadd.xlane.f32.xlu0 %v2463
    %v2465 = vpop.xlane.xlu0 %2464
    %v2466 = vsel %vm162, %v2458, 0.0
    %2467 = vadd.xlane.f32.xlu0 %v2466
    %v2468 = vpop.xlane.xlu0 %2467
    %v2469 = vsel %vm162, %v2459, 0.0
    %2470 = vadd.xlane.f32.xlu0 %v2469
    %v2471 = vpop.xlane.xlu0 %2470
    %v2472 = vmul.f32 %v2462, %v175
    %v2473 = vmul.f32 %v2465, %v175
    %v2474 = vmul.f32 %v2468, %v175
    %v2475 = vmul.f32 %v2471, %v175
    %v2476 = vadd.f32 %v2472, 1e-05
    %v2477 = vadd.f32 %v2473, 1e-05
    %v2478 = vadd.f32 %v2474, 1e-05
    %v2479 = vadd.f32 %v2475, 1e-05
    %v2480 = vrsqrt.pop %v2476
    %v2481 = vrsqrt.pop %v2477
    %v2482 = vrsqrt.pop %v2478
    %v2483 = vrsqrt.pop %v2479
    %v2484 = vmul.f32 %v2452, %v2480
    %v2485 = vmul.f32 %v2453, %v2481
    %v2486 = vmul.f32 %v2454, %v2482
    %v2487 = vmul.f32 %v2455, %v2483
    %v2488 = vlaneseq
    %v2489 = vshrl.u32 %v2488, 7
    %v2490 = vsub.s32 0, %v2489
    %v2491 = vrot.slane %v31, %v2490
    %v2492 = vmul.f32 %v2484, %v2491
    %v2493 = vmul.f32 %v2485, %v2491
    %v2494 = vmul.f32 %v2486, %v2491
    %v2495 = vmul.f32 %v2487, %v2491
    %v2496 = vlaneseq
    %v2497 = vshrl.u32 %v2496, 7
    %v2498 = vsub.s32 1, %v2497
    %v2499 = vrot.slane %v31, %v2498
    %v2500 = vadd.f32 %v2492, %v2499
    %v2501 = vadd.f32 %v2493, %v2499
    %v2502 = vadd.f32 %v2494, %v2499
    %v2503 = vadd.f32 %v2495, %v2499
    %v2504 = vsel %vm162, %v2500, 0.0
    %v2505 = vsel %vm162, %v2501, 0.0
    %v2506 = vadd.f32 %v2504, %v2505
    %v2507 = vrot.slane %v2506, 4
    %v2508 = vadd.f32 %v2506, %v2507
    %v2509 = vrot.slane %v2508, 2
    %v2510 = vadd.f32 %v2508, %v2509
    %v2511 = vrot.slane %v2510, 1
    %v2512 = vadd.f32 %v2510, %v2511
    %v2513 = vrcp.pop 16.0
    %v2514 = vmul.f32 %v2512, %v2513
    %v2515 = vsel %vm162, %v2502, 0.0
    %v2516 = vsel %vm162, %v2503, 0.0
    %v2517 = vadd.f32 %v2515, %v2516
    %v2518 = vrot.slane %v2517, 4
    %v2519 = vadd.f32 %v2517, %v2518
    %v2520 = vrot.slane %v2519, 2
    %v2521 = vadd.f32 %v2519, %v2520
    %v2522 = vrot.slane %v2521, 1
    %v2523 = vadd.f32 %v2521, %v2522
    %v2524 = vmul.f32 %v2523, %v2513
    %v2525 = vsel %vm428, %v2514, %v2524
    %v2526 = vlaneseq
    %v2527 = vshrl.u32 %v2526, 7
    %v2528 = vsub.s32 2, %v2527
    %v2529 = vrot.slane %v31, %v2528
    %v2531 = vsel %vm162, %v2525, 0
    %2533 = vmatprep.subr.mxu0 0.0
    %2534 = vmatpush1.msra.mxu0 %v27
    %2535 = vmatprep.subr.mxu0 0.0
    %2536 = vmatpush1.msra.mxu0 %v28
    %2537 = vmatprep.subr.mxu0 0.0
    %2538 = vmatpush1.msra.mxu0 %v29
    %2539 = vmatprep.subr.mxu0 0.0
    %2540 = vmatpush1.msra.mxu0 %v30
    %2541 = vmatprep.subr.mxu0 0.0
    %2542 = vmatpush1.msra.mxu0 0.0
    %2543 = vmatprep.subr.mxu0 0.0
    %2544 = vmatpush1.msra.mxu0 0.0
    %2545 = vmatprep.subr.mxu0 0.0
    %2546 = vmatpush1.msra.mxu0 0.0
    %2547 = vmatprep.subr.mxu0 0.0
    %2548 = vmatpush1.msra.mxu0 0.0
    %2549 = vmatprep.subr.mxu0 0.0
    %2550 = vmatpush1.msra.mxu0 0.0
    %2551 = vmatprep.subr.mxu0 0.0
    %2552 = vmatpush1.msra.mxu0 0.0
    %2553 = vmatprep.subr.mxu0 0.0
    %2554 = vmatpush1.msra.mxu0 0.0
    %2555 = vmatprep.subr.mxu0 0.0
    %2556 = vmatpush1.msra.mxu0 0.0
    %2557 = vmatprep.subr.mxu0 0.0
    %2558 = vmatpush1.msra.mxu0 0.0
    %2559 = vmatprep.subr.mxu0 0.0
    %2560 = vmatpush1.msra.mxu0 0.0
    %2561 = vmatprep.subr.mxu0 0.0
    %2562 = vmatpush1.msra.mxu0 0.0
    %2563 = vmatprep.subr.mxu0 0.0
    %2564 = vmatpush1.msra.mxu0 0.0
    %2565 = vmatprep.subr.mxu0 0.0
    %2566 = vmatpush1.msra.mxu0 0.0
    %2567 = vmatprep.subr.mxu0 0.0
    %2568 = vmatpush1.msra.mxu0 0.0
    %2569 = vmatprep.subr.mxu0 0.0
    %2570 = vmatpush1.msra.mxu0 0.0
    %2571 = vmatprep.subr.mxu0 0.0
    %2572 = vmatpush1.msra.mxu0 0.0
    %2573 = vmatprep.subr.mxu0 0.0
    %2574 = vmatpush1.msra.mxu0 0.0
    %2575 = vmatprep.subr.mxu0 0.0
    %2576 = vmatpush1.msra.mxu0 0.0
    %2577 = vmatprep.subr.mxu0 0.0
    %2578 = vmatpush1.msra.mxu0 0.0
    %2579 = vmatprep.subr.mxu0 0.0
    %2580 = vmatpush1.msra.mxu0 0.0
    %2581 = vmatprep.subr.mxu0 0.0
    %2582 = vmatpush1.msra.mxu0 0.0
    %2583 = vmatprep.subr.mxu0 0.0
    %2584 = vmatpush1.msra.mxu0 0.0
    %2585 = vmatprep.subr.mxu0 0.0
    %2586 = vmatpush1.msra.mxu0 0.0
    %2587 = vmatprep.subr.mxu0 0.0
    %2588 = vmatpush1.msra.mxu0 0.0
    %2589 = vmatprep.subr.mxu0 0.0
    %2590 = vmatpush1.msra.mxu0 0.0
    %2591 = vmatprep.subr.mxu0 0.0
    %2592 = vmatpush1.msra.mxu0 0.0
    %2593 = vmatprep.subr.mxu0 0.0
    %2594 = vmatpush1.msra.mxu0 0.0
    %2595 = vmatprep.subr.mxu0 0.0
    %2596 = vmatpush1.msra.mxu0 0.0
    %2597 = vmatprep.mubr.f32.mxu0 0.0
    %2598 = vmatmul.mubr.f32.gmra.mrb[0].mxu0 %v2531
    %v2599 = vpop.f32.mrb[0].mxu0
    %v2600 = vadd.f32 %v2529, %v2599
    %v2601 = vpop.f32.mrb[0].mxu0
    %2602 = vdwg.mxu0
    %2603 = vst [vmem:[#allocation2] sm:$0x3] %v2600
    // Predicated region
    $region14: #{mamba_classifier_forward.1} parent=1 // pred_check
      _
    $region15: #{mamba_classifier_forward.1} parent=1 // pred_check_branch
      %2605 = sbr.rel (0) target = $region17
    $region16: #{mamba_classifier_forward.1} parent=1 // pred_region
      %s2607 = ssub.s32 32, 32
      %2608 = vsyncadd [#allocation3], %s2607
      %s2610 = sshll.u32 [#allocation2], 4
      %s2611 = int_to_ptr.vmem [resolvable:$true] %s2610
      %2613 = dma.vmem_to_hbm [thread:$0]  %s2611, 32, %s3, [#allocation3]
    $region17: #{mamba_classifier_forward.1} parent=1 // pred_fallthru
      _
    // Predicated region
    $region18: #{mamba_classifier_forward.1} parent=1 // pred_check
      _
    $region19: #{mamba_classifier_forward.1} parent=1 // pred_check_branch
      %2615 = sbr.rel (0) target = $region21
    $region20: #{mamba_classifier_forward.1} parent=1 // pred_region
      %2616 = dma.done [#allocation3], 32
    $region21: #{mamba_classifier_forward.1} parent=1 // pred_fallthru
      _
    %2617 = vsyncpa [#allocation3], 1

</llo_original>
